<compile_context>
chip_gen: v6e
topology: v6e:2x2x1
jax: 0.10.0
libtpu: 0.0.40
codegen_flags: <defaults>
</compile_context>

<pallas_src>
import functools

import jax
import jax.numpy as jnp
from jax.experimental import pallas as pl
from jax.experimental.pallas import tpu as pltpu

_LANE = 128                     # pad every matmul N to a multiple of this
_TM_MAX = 512                   # M-tile rows (multiple of 16: f32 & bf16 legal)
_COMPUTE_DTYPE = jnp.bfloat16   # MXU input dtype; accumulation stays f32


def _round_up(x, m):
    return ((x + m - 1) // m) * m


# ----------------------------------------------------------------------------
# Pallas kernels
# ----------------------------------------------------------------------------
def _linear_kernel(x_ref, w_ref, b_ref, o_ref, *, relu):
    """One (TM, K) x (K, N) tile: matmul + bias (+ ReLU), f32 accumulation."""
    acc = jnp.dot(x_ref[...], w_ref[...], preferred_element_type=jnp.float32)
    acc = acc + b_ref[...]                      # b_ref: (1, N) f32, broadcasts
    if relu:
        acc = jnp.maximum(acc, 0.0)
    o_ref[...] = acc.astype(o_ref.dtype)


def pallas_linear(x, w, b, *, relu, out_dtype):
    """x: (M, K), w: (K, N), b: (1, N) f32 -> (M, N).  N must be 128-aligned."""
    M, K = x.shape
    K2, N = w.shape
    assert K == K2 and N % _LANE == 0 and b.shape == (1, N)
    tm = M if M <= _TM_MAX else _TM_MAX          # full-extent block when small
    grid_m = pl.cdiv(M, tm)
    kernel = functools.partial(_linear_kernel, relu=relu)
    return pl.pallas_call(
        kernel,
        out_shape=jax.ShapeDtypeStruct((M, N), out_dtype),
        grid=(grid_m,),
        in_specs=[
            pl.BlockSpec((tm, K), lambda i: (i, 0)),   # X: tiled over M
            pl.BlockSpec((K, N), lambda i: (0, 0)),    # W: stays resident
            pl.BlockSpec((1, N), lambda i: (0, 0)),    # bias: stays resident
        ],
        out_specs=pl.BlockSpec((tm, N), lambda i: (i, 0)),
        compiler_params=pltpu.CompilerParams(
            dimension_semantics=("parallel",),   # shard M tiles over v7x 2 TCs
        ),
    )(x, w, b)


def _head_kernel(x_ref, w1_ref, b1_ref, w2_ref, b2_ref, o_ref):
    """Fused fc1 (+ReLU) + fc2 on one (TM, K) tile of flattened conv features."""
    h = jnp.dot(x_ref[...], w1_ref[...], preferred_element_type=jnp.float32)
    h = jnp.maximum(h + b1_ref[...], 0.0)
    q = jnp.dot(h.astype(w2_ref.dtype), w2_ref[...],
                preferred_element_type=jnp.float32)
    o_ref[...] = (q + b2_ref[...]).astype(o_ref.dtype)


def pallas_mlp_head(x, w1, b1, w2, b2):
    """x: (M, K), w1: (K, H), w2: (H, N) -> (M, N) f32.  H, N 128-aligned."""
    M, K = x.shape
    K2, H = w1.shape
    H2, N = w2.shape
    assert K == K2 and H == H2 and H % _LANE == 0 and N % _LANE == 0
    tm = M if M <= _TM_MAX else _TM_MAX
    grid_m = pl.cdiv(M, tm)
    return pl.pallas_call(
        _head_kernel,
        out_shape=jax.ShapeDtypeStruct((M, N), jnp.float32),
        grid=(grid_m,),
        in_specs=[
            pl.BlockSpec((tm, K), lambda i: (i, 0)),
            pl.BlockSpec((K, H), lambda i: (0, 0)),
            pl.BlockSpec((1, H), lambda i: (0, 0)),
            pl.BlockSpec((H, N), lambda i: (0, 0)),
            pl.BlockSpec((1, N), lambda i: (0, 0)),
        ],
        out_specs=pl.BlockSpec((tm, N), lambda i: (i, 0)),
        compiler_params=pltpu.CompilerParams(
            dimension_semantics=("parallel",),
        ),
    )(x, w1, b1, w2, b2)


# ----------------------------------------------------------------------------
# NHWC im2col glue (no FLOPs) + conv wrapper
# ----------------------------------------------------------------------------
def _im2col_nhwc(x, kh, kw, stride):
    """x: (B, H, W, C) -> patches (B*oh*ow, kh*kw*C); row order (di, dj, c)."""
    B, H, W, C = x.shape
    oh = (H - kh) // stride + 1
    ow = (W - kw) // stride + 1
    cols = []
    for di in range(kh):
        for dj in range(kw):
            cols.append(
                x[:, di:di + stride * oh:stride, dj:dj + stride * ow:stride, :])
    patches = jnp.stack(cols, axis=3)               # (B, oh, ow, kh*kw, C)
    return patches.reshape(B * oh * ow, kh * kw * C), oh, ow


def conv2d_relu_nhwc(x, w_mat, b_pad, kh, kw, stride):
    """NHWC Conv2d + ReLU via im2col + Pallas matmul.

    x: (B, H, W, C); w_mat: (kh*kw*C, OC_pad); b_pad: (1, OC_pad).
    Returns (B, oh, ow, OC_pad) in the compute dtype (padded channels are 0).
    """
    B = x.shape[0]
    patches, oh, ow = _im2col_nhwc(x, kh, kw, stride)
    out = pallas_linear(patches, w_mat, b_pad, relu=True, out_dtype=x.dtype)
    return out.reshape(B, oh, ow, w_mat.shape[1])


# ----------------------------------------------------------------------------
# Parameters (PyTorch layouts) + one-time re-layout into kernel layouts
# ----------------------------------------------------------------------------
def _conv_out(s, k, st):
    return (s - k) // st + 1


def init_params(key, input_shape, num_actions):
    """Random f32 params in PyTorch layouts: conv OIHW, fc (in, out)."""
    c, h, w = input_shape
    h1, w1 = _conv_out(h, 8, 4), _conv_out(w, 8, 4)
    h2, w2 = _conv_out(h1, 4, 2), _conv_out(w1, 4, 2)
    h3, w3 = _conv_out(h2, 3, 1), _conv_out(w2, 3, 1)
    conv_out_size = 64 * h3 * w3

    ks = jax.random.split(key, 10)
    s = 0.05
    params = {
        "conv1_w": s * jax.random.normal(ks[0], (32, c, 8, 8), jnp.float32),
        "conv1_b": s * jax.random.normal(ks[1], (32,), jnp.float32),
        "conv2_w": s * jax.random.normal(ks[2], (64, 32, 4, 4), jnp.float32),
        "conv2_b": s * jax.random.normal(ks[3], (64,), jnp.float32),
        "conv3_w": s * jax.random.normal(ks[4], (64, 64, 3, 3), jnp.float32),
        "conv3_b": s * jax.random.normal(ks[5], (64,), jnp.float32),
        "fc1_w": s * jax.random.normal(ks[6], (conv_out_size, 512), jnp.float32),
        "fc1_b": s * jax.random.normal(ks[7], (512,), jnp.float32),
        "fc2_w": s * jax.random.normal(ks[8], (512, num_actions), jnp.float32),
        "fc2_b": s * jax.random.normal(ks[9], (num_actions,), jnp.float32),
    }
    return params, (h3, w3)


def prepare_params(params, h3, w3, dtype=_COMPUTE_DTYPE):
    """One-time re-layout of PyTorch-style params into kernel layouts."""
    def conv_pack(w, b):
        oc, c, kh, kw = w.shape
        n_pad = _round_up(oc, _LANE)
        # rows ordered (di, dj, c) to match _im2col_nhwc; columns = out channels
        w_mat = jnp.transpose(w, (2, 3, 1, 0)).reshape(kh * kw * c, oc)
        w_mat = jnp.pad(w_mat, ((0, 0), (0, n_pad - oc))).astype(dtype)
        b_pad = jnp.pad(b, (0, n_pad - oc)).reshape(1, n_pad).astype(jnp.float32)
        return w_mat, b_pad

    kp = {}
    kp["conv1_w"], kp["conv1_b"] = conv_pack(params["conv1_w"], params["conv1_b"])
    kp["conv2_w"], kp["conv2_b"] = conv_pack(params["conv2_w"], params["conv2_b"])
    kp["conv3_w"], kp["conv3_b"] = conv_pack(params["conv3_w"], params["conv3_b"])

    # fc1 rows are PyTorch NCHW-flatten order (c, h, w); permute to NHWC (h, w, c)
    fc1_w = params["fc1_w"].reshape(64, h3, w3, 512)
    fc1_w = jnp.transpose(fc1_w, (1, 2, 0, 3)).reshape(h3 * w3 * 64, 512)
    kp["fc1_w"] = fc1_w.astype(dtype)
    kp["fc1_b"] = params["fc1_b"].reshape(1, 512).astype(jnp.float32)

    # fc2: pad num_actions up to 128 lanes (sliced back after the kernel).
    na = params["fc2_w"].shape[1]
    n_pad = _round_up(na, _LANE)
    kp["fc2_w"] = jnp.pad(params["fc2_w"], ((0, 0), (0, n_pad - na))).astype(dtype)
    kp["fc2_b"] = (jnp.pad(params["fc2_b"], (0, n_pad - na))
                   .reshape(1, n_pad).astype(jnp.float32))
    return kp


# ----------------------------------------------------------------------------
# Forward pass (kernel path) + pure-JAX f32 reference
# ----------------------------------------------------------------------------
@functools.partial(jax.jit, static_argnames=("num_actions",))
def atari_dqn_forward(kparams, x, *, num_actions):
    """x: (B, C, H, W) f32 (PyTorch layout) -> (B, num_actions) f32."""
    B = x.shape[0]
    # One-time NCHW -> NHWC + bf16 cast; everything downstream stays NHWC.
    h = jnp.transpose(x, (0, 2, 3, 1)).astype(_COMPUTE_DTYPE)
    h = conv2d_relu_nhwc(h, kparams["conv1_w"], kparams["conv1_b"], 8, 8, 4)
    h = conv2d_relu_nhwc(h[..., :32], kparams["conv2_w"], kparams["conv2_b"], 4, 4, 2)
    h = conv2d_relu_nhwc(h[..., :64], kparams["conv3_w"], kparams["conv3_b"], 3, 3, 1)
    # PyTorch view(B, -1) flattens NCHW as (c, h, w); we flatten NHWC (h, w, c)
    # and compensated by permuting fc1's weight rows once at init.
    h = h[..., :64].reshape(B, -1)
    q = pallas_mlp_head(h, kparams["fc1_w"], kparams["fc1_b"],
                        kparams["fc2_w"], kparams["fc2_b"])
    return q[:, :num_actions]


@jax.jit
def reference_forward(params, x):
    """Pure-JAX f32 reference mirroring the PyTorch module (NCHW)."""
    def conv(h, w, b, stride):
        out = jax.lax.conv_general_dilated(
            h, w, window_strides=(stride, stride), padding="VALID",
            dimension_numbers=("NCHW", "OIHW", "NCHW"))
        return jax.nn.relu(out + b[None, :, None, None])
    h = conv(x, params["conv1_w"], params["conv1_b"], 4)
    h = conv(h, params["conv2_w"], params["conv2_b"], 2)
    h = conv(h, params["conv3_w"], params["conv3_b"], 1)
    h = h.reshape(x.shape[0], -1)
    h = jax.nn.relu(h @ params["fc1_w"] + params["fc1_b"])
    return h @ params["fc2_w"] + params["fc2_b"]


if __name__ == "__main__":
    # Small but conv-valid shapes: 44x44 -> 10x10 -> 4x4 -> 2x2 spatial.
    C, H, W = 4, 44, 44
    NUM_ACTIONS = 6

    key = jax.random.PRNGKey(0)
    k_params, k_x1, k_x2 = jax.random.split(key, 3)
    params, (h3, w3) = init_params(k_params, (C, H, W), NUM_ACTIONS)
    kparams = prepare_params(params, h3, w3)

    # Batch 2: every matmul fits a single M tile.
    x_small = jax.random.normal(k_x1, (2, C, H, W), jnp.float32)
    q_small = atari_dqn_forward(kparams, x_small, num_actions=NUM_ACTIONS)
    jax.block_until_ready(q_small)
    assert q_small.shape == (2, NUM_ACTIONS)

    # Batch 6: conv1's M (= 6*10*10 = 600) exercises the multi-tile pipelined
    # path (TM = 512 plus a partial tail block).
    x_big = jax.random.normal(k_x2, (6, C, H, W), jnp.float32)
    q_big = atari_dqn_forward(kparams, x_big, num_actions=NUM_ACTIONS)
    jax.block_until_ready(q_big)
    assert q_big.shape == (6, NUM_ACTIONS)

    # Correctness vs. the f32 reference (bf16 matmul inputs, f32 accumulation).
    for x_in, q_out in ((x_small, q_small), (x_big, q_big)):
        q_ref = reference_forward(params, x_in)
        assert jnp.allclose(q_out, q_ref, atol=3e-2, rtol=5e-2), (
            float(jnp.max(jnp.abs(q_out - q_ref))))

    print("KERNEL_OK")
</pallas_src>

<mosaic_0001>
module attributes {stable_mosaic.version = 11 : i64} {
  func.func @_linear_kernel(%arg0: i32, %arg1: memref<200x256xbf16, #tpu.memory_space<vmem>>, %arg2: memref<256x128xbf16, #tpu.memory_space<vmem>>, %arg3: memref<1x128xf32, #tpu.memory_space<vmem>>, %arg4: memref<200x128xbf16, #tpu.memory_space<vmem>>) attributes {dimension_semantics = [#tpu.dimension_semantics<parallel>], iteration_bounds = array<i64: 1>, scalar_prefetch = 0 : i64, scratch_operands = 0 : i64, tpu.core_type = #tpu.core_type<tc>, window_params = [{transform_indices = @transform_0, window_bounds = array<i64: 200, 256>}, {pipeline_mode = #tpu.pipeline_mode<synchronous>, transform_indices = @transform_1, window_bounds = array<i64: 256, 128>}, {pipeline_mode = #tpu.pipeline_mode<synchronous>, transform_indices = @transform_2, window_bounds = array<i64: 1, 128>}, {transform_indices = @transform_3, window_bounds = array<i64: 200, 128>}]} {
    %c0 = arith.constant 0 : index
    %c0_0 = arith.constant 0 : index
    %0 = vector.load %arg1[%c0, %c0_0] : memref<200x256xbf16, #tpu.memory_space<vmem>>, vector<200x256xbf16>
    %c0_1 = arith.constant 0 : index
    %c0_2 = arith.constant 0 : index
    %1 = vector.load %arg2[%c0_1, %c0_2] : memref<256x128xbf16, #tpu.memory_space<vmem>>, vector<256x128xbf16>
    %cst = arith.constant dense<0.000000e+00> : vector<200x128xf32>
    %2 = tpu.matmul %0, %1, %cst {dimension_numbers = #tpu.dot_dimension_numbers<[1], [0], [0], [1], [0, 0, 1, 1], [], []>} : vector<200x256xbf16>, vector<256x128xbf16>, vector<200x128xf32> -> vector<200x128xf32>
    %c0_3 = arith.constant 0 : index
    %c0_4 = arith.constant 0 : index
    %3 = vector.load %arg3[%c0_3, %c0_4] : memref<1x128xf32, #tpu.memory_space<vmem>>, vector<1x128xf32>
    %4 = vector.broadcast %3 : vector<1x128xf32> to vector<200x128xf32>
    %5 = arith.addf %2, %4 : vector<200x128xf32>
    %cst_5 = arith.constant 0.000000e+00 : f32
    %6 = vector.broadcast %cst_5 : f32 to vector<200x128xf32>
    %7 = arith.maximumf %5, %6 : vector<200x128xf32>
    %8 = arith.truncf %7 : vector<200x128xf32> to vector<200x128xbf16>
    %c0_6 = arith.constant 0 : index
    %c0_7 = arith.constant 0 : index
    %9 = vector.load %arg4[%c0_6, %c0_7] : memref<200x128xbf16, #tpu.memory_space<vmem>>, vector<200x128xbf16>
    tpu.vector_store %arg4[%c0_6, %c0_7], %8 {strides = array<i32>} : memref<200x128xbf16, #tpu.memory_space<vmem>>, vector<200x128xbf16>,
    return
  }
  func.func @transform_0(%arg0: i32) -> (i32, i32) {
    %c0_i32 = arith.constant 0 : i32
    %c0_i32_0 = arith.constant 0 : i32
    return %arg0, %c0_i32 : i32, i32
  }
  func.func @transform_1(%arg0: i32) -> (i32, i32) {
    %c0_i32 = arith.constant 0 : i32
    %c0_i32_0 = arith.constant 0 : i32
    %c0_i32_1 = arith.constant 0 : i32
    return %c0_i32, %c0_i32_0 : i32, i32
  }
  func.func @transform_2(%arg0: i32) -> (i32, i32) {
    %c0_i32 = arith.constant 0 : i32
    %c0_i32_0 = arith.constant 0 : i32
    %c0_i32_1 = arith.constant 0 : i32
    return %c0_i32, %c0_i32_0 : i32, i32
  }
  func.func @transform_3(%arg0: i32) -> (i32, i32) {
    %c0_i32 = arith.constant 0 : i32
    %c0_i32_0 = arith.constant 0 : i32
    return %arg0, %c0_i32 : i32, i32
  }
}

module attributes {stable_mosaic.version = 11 : i64} {
  func.func @_linear_kernel(%arg0: i32, %arg1: memref<32x512xbf16, #tpu.memory_space<vmem>>, %arg2: memref<512x128xbf16, #tpu.memory_space<vmem>>, %arg3: memref<1x128xf32, #tpu.memory_space<vmem>>, %arg4: memref<32x128xbf16, #tpu.memory_space<vmem>>) attributes {dimension_semantics = [#tpu.dimension_semantics<parallel>], iteration_bounds = array<i64: 1>, scalar_prefetch = 0 : i64, scratch_operands = 0 : i64, tpu.core_type = #tpu.core_type<tc>, window_params = [{transform_indices = @transform_0, window_bounds = array<i64: 32, 512>}, {pipeline_mode = #tpu.pipeline_mode<synchronous>, transform_indices = @transform_1, window_bounds = array<i64: 512, 128>}, {pipeline_mode = #tpu.pipeline_mode<synchronous>, transform_indices = @transform_2, window_bounds = array<i64: 1, 128>}, {transform_indices = @transform_3, window_bounds = array<i64: 32, 128>}]} {
    %c0 = arith.constant 0 : index
    %c0_0 = arith.constant 0 : index
    %0 = vector.load %arg1[%c0, %c0_0] : memref<32x512xbf16, #tpu.memory_space<vmem>>, vector<32x512xbf16>
    %c0_1 = arith.constant 0 : index
    %c0_2 = arith.constant 0 : index
    %1 = vector.load %arg2[%c0_1, %c0_2] : memref<512x128xbf16, #tpu.memory_space<vmem>>, vector<512x128xbf16>
    %cst = arith.constant dense<0.000000e+00> : vector<32x128xf32>
    %2 = tpu.matmul %0, %1, %cst {dimension_numbers = #tpu.dot_dimension_numbers<[1], [0], [0], [1], [0, 0, 1, 1], [], []>} : vector<32x512xbf16>, vector<512x128xbf16>, vector<32x128xf32> -> vector<32x128xf32>
    %c0_3 = arith.constant 0 : index
    %c0_4 = arith.constant 0 : index
    %3 = vector.load %arg3[%c0_3, %c0_4] : memref<1x128xf32, #tpu.memory_space<vmem>>, vector<1x128xf32>
    %4 = vector.broadcast %3 : vector<1x128xf32> to vector<32x128xf32>
    %5 = arith.addf %2, %4 : vector<32x128xf32>
    %cst_5 = arith.constant 0.000000e+00 : f32
    %6 = vector.broadcast %cst_5 : f32 to vector<32x128xf32>
    %7 = arith.maximumf %5, %6 : vector<32x128xf32>
    %8 = arith.truncf %7 : vector<32x128xf32> to vector<32x128xbf16>
    %c0_6 = arith.constant 0 : index
    %c0_7 = arith.constant 0 : index
    %9 = vector.load %arg4[%c0_6, %c0_7] : memref<32x128xbf16, #tpu.memory_space<vmem>>, vector<32x128xbf16>
    tpu.vector_store %arg4[%c0_6, %c0_7], %8 {strides = array<i32>} : memref<32x128xbf16, #tpu.memory_space<vmem>>, vector<32x128xbf16>,
    return
  }
  func.func @transform_0(%arg0: i32) -> (i32, i32) {
    %c0_i32 = arith.constant 0 : i32
    %c0_i32_0 = arith.constant 0 : i32
    return %arg0, %c0_i32 : i32, i32
  }
  func.func @transform_1(%arg0: i32) -> (i32, i32) {
    %c0_i32 = arith.constant 0 : i32
    %c0_i32_0 = arith.constant 0 : i32
    %c0_i32_1 = arith.constant 0 : i32
    return %c0_i32, %c0_i32_0 : i32, i32
  }
  func.func @transform_2(%arg0: i32) -> (i32, i32) {
    %c0_i32 = arith.constant 0 : i32
    %c0_i32_0 = arith.constant 0 : i32
    %c0_i32_1 = arith.constant 0 : i32
    return %c0_i32, %c0_i32_0 : i32, i32
  }
  func.func @transform_3(%arg0: i32) -> (i32, i32) {
    %c0_i32 = arith.constant 0 : i32
    %c0_i32_0 = arith.constant 0 : i32
    return %arg0, %c0_i32 : i32, i32
  }
}

module attributes {stable_mosaic.version = 11 : i64} {
  func.func @_linear_kernel(%arg0: i32, %arg1: memref<8x576xbf16, #tpu.memory_space<vmem>>, %arg2: memref<576x128xbf16, #tpu.memory_space<vmem>>, %arg3: memref<1x128xf32, #tpu.memory_space<vmem>>, %arg4: memref<8x128xbf16, #tpu.memory_space<vmem>>) attributes {dimension_semantics = [#tpu.dimension_semantics<parallel>], iteration_bounds = array<i64: 1>, scalar_prefetch = 0 : i64, scratch_operands = 0 : i64, tpu.core_type = #tpu.core_type<tc>, window_params = [{transform_indices = @transform_0, window_bounds = array<i64: 8, 576>}, {pipeline_mode = #tpu.pipeline_mode<synchronous>, transform_indices = @transform_1, window_bounds = array<i64: 576, 128>}, {pipeline_mode = #tpu.pipeline_mode<synchronous>, transform_indices = @transform_2, window_bounds = array<i64: 1, 128>}, {transform_indices = @transform_3, window_bounds = array<i64: 8, 128>}]} {
    %c0 = arith.constant 0 : index
    %c0_0 = arith.constant 0 : index
    %0 = vector.load %arg1[%c0, %c0_0] : memref<8x576xbf16, #tpu.memory_space<vmem>>, vector<8x576xbf16>
    %c0_1 = arith.constant 0 : index
    %c0_2 = arith.constant 0 : index
    %1 = vector.load %arg2[%c0_1, %c0_2] : memref<576x128xbf16, #tpu.memory_space<vmem>>, vector<576x128xbf16>
    %cst = arith.constant dense<0.000000e+00> : vector<8x128xf32>
    %2 = tpu.matmul %0, %1, %cst {dimension_numbers = #tpu.dot_dimension_numbers<[1], [0], [0], [1], [0, 0, 1, 1], [], []>} : vector<8x576xbf16>, vector<576x128xbf16>, vector<8x128xf32> -> vector<8x128xf32>
    %c0_3 = arith.constant 0 : index
    %c0_4 = arith.constant 0 : index
    %3 = vector.load %arg3[%c0_3, %c0_4] : memref<1x128xf32, #tpu.memory_space<vmem>>, vector<1x128xf32>
    %4 = vector.broadcast %3 : vector<1x128xf32> to vector<8x128xf32>
    %5 = arith.addf %2, %4 : vector<8x128xf32>
    %cst_5 = arith.constant 0.000000e+00 : f32
    %6 = vector.broadcast %cst_5 : f32 to vector<8x128xf32>
    %7 = arith.maximumf %5, %6 : vector<8x128xf32>
    %8 = arith.truncf %7 : vector<8x128xf32> to vector<8x128xbf16>
    %c0_6 = arith.constant 0 : index
    %c0_7 = arith.constant 0 : index
    %9 = vector.load %arg4[%c0_6, %c0_7] : memref<8x128xbf16, #tpu.memory_space<vmem>>, vector<8x128xbf16>
    tpu.vector_store %arg4[%c0_6, %c0_7], %8 {strides = array<i32>} : memref<8x128xbf16, #tpu.memory_space<vmem>>, vector<8x128xbf16>,
    return
  }
  func.func @transform_0(%arg0: i32) -> (i32, i32) {
    %c0_i32 = arith.constant 0 : i32
    %c0_i32_0 = arith.constant 0 : i32
    return %arg0, %c0_i32 : i32, i32
  }
  func.func @transform_1(%arg0: i32) -> (i32, i32) {
    %c0_i32 = arith.constant 0 : i32
    %c0_i32_0 = arith.constant 0 : i32
    %c0_i32_1 = arith.constant 0 : i32
    return %c0_i32, %c0_i32_0 : i32, i32
  }
  func.func @transform_2(%arg0: i32) -> (i32, i32) {
    %c0_i32 = arith.constant 0 : i32
    %c0_i32_0 = arith.constant 0 : i32
    %c0_i32_1 = arith.constant 0 : i32
    return %c0_i32, %c0_i32_0 : i32, i32
  }
  func.func @transform_3(%arg0: i32) -> (i32, i32) {
    %c0_i32 = arith.constant 0 : i32
    %c0_i32_0 = arith.constant 0 : i32
    return %arg0, %c0_i32 : i32, i32
  }
}

module attributes {stable_mosaic.version = 11 : i64} {
  func.func @_head_kernel(%arg0: i32, %arg1: memref<2x256xbf16, #tpu.memory_space<vmem>>, %arg2: memref<256x512xbf16, #tpu.memory_space<vmem>>, %arg3: memref<1x512xf32, #tpu.memory_space<vmem>>, %arg4: memref<512x128xbf16, #tpu.memory_space<vmem>>, %arg5: memref<1x128xf32, #tpu.memory_space<vmem>>, %arg6: memref<2x128xf32, #tpu.memory_space<vmem>>) attributes {dimension_semantics = [#tpu.dimension_semantics<parallel>], iteration_bounds = array<i64: 1>, scalar_prefetch = 0 : i64, scratch_operands = 0 : i64, tpu.core_type = #tpu.core_type<tc>, window_params = [{transform_indices = @transform_0, window_bounds = array<i64: 2, 256>}, {pipeline_mode = #tpu.pipeline_mode<synchronous>, transform_indices = @transform_1, window_bounds = array<i64: 256, 512>}, {pipeline_mode = #tpu.pipeline_mode<synchronous>, transform_indices = @transform_2, window_bounds = array<i64: 1, 512>}, {pipeline_mode = #tpu.pipeline_mode<synchronous>, transform_indices = @transform_3, window_bounds = array<i64: 512, 128>}, {pipeline_mode = #tpu.pipeline_mode<synchronous>, transform_indices = @transform_4, window_bounds = array<i64: 1, 128>}, {transform_indices = @transform_5, window_bounds = array<i64: 2, 128>}]} {
    %c0 = arith.constant 0 : index
    %c0_0 = arith.constant 0 : index
    %0 = vector.load %arg1[%c0, %c0_0] : memref<2x256xbf16, #tpu.memory_space<vmem>>, vector<2x256xbf16>
    %c0_1 = arith.constant 0 : index
    %c0_2 = arith.constant 0 : index
    %1 = vector.load %arg2[%c0_1, %c0_2] : memref<256x512xbf16, #tpu.memory_space<vmem>>, vector<256x512xbf16>
    %cst = arith.constant dense<0.000000e+00> : vector<2x512xf32>
    %2 = tpu.matmul %0, %1, %cst {dimension_numbers = #tpu.dot_dimension_numbers<[1], [0], [0], [1], [0, 0, 1, 1], [], []>} : vector<2x256xbf16>, vector<256x512xbf16>, vector<2x512xf32> -> vector<2x512xf32>
    %c0_3 = arith.constant 0 : index
    %c0_4 = arith.constant 0 : index
    %3 = vector.load %arg3[%c0_3, %c0_4] : memref<1x512xf32, #tpu.memory_space<vmem>>, vector<1x512xf32>
    %4 = vector.broadcast %3 : vector<1x512xf32> to vector<2x512xf32>
    %5 = arith.addf %2, %4 : vector<2x512xf32>
    %cst_5 = arith.constant 0.000000e+00 : f32
    %6 = vector.broadcast %cst_5 : f32 to vector<2x512xf32>
    %7 = arith.maximumf %5, %6 : vector<2x512xf32>
    %8 = arith.truncf %7 : vector<2x512xf32> to vector<2x512xbf16>
    %c0_6 = arith.constant 0 : index
    %c0_7 = arith.constant 0 : index
    %9 = vector.load %arg4[%c0_6, %c0_7] : memref<512x128xbf16, #tpu.memory_space<vmem>>, vector<512x128xbf16>
    %cst_8 = arith.constant dense<0.000000e+00> : vector<2x128xf32>
    %10 = tpu.matmul %8, %9, %cst_8 {dimension_numbers = #tpu.dot_dimension_numbers<[1], [0], [0], [1], [0, 0, 1, 1], [], []>} : vector<2x512xbf16>, vector<512x128xbf16>, vector<2x128xf32> -> vector<2x128xf32>
    %c0_9 = arith.constant 0 : index
    %c0_10 = arith.constant 0 : index
    %11 = vector.load %arg5[%c0_9, %c0_10] : memref<1x128xf32, #tpu.memory_space<vmem>>, vector<1x128xf32>
    %12 = vector.broadcast %11 : vector<1x128xf32> to vector<2x128xf32>
    %13 = arith.addf %10, %12 : vector<2x128xf32>
    %c0_11 = arith.constant 0 : index
    %c0_12 = arith.constant 0 : index
    %14 = vector.load %arg6[%c0_11, %c0_12] : memref<2x128xf32, #tpu.memory_space<vmem>>, vector<2x128xf32>
    tpu.vector_store %arg6[%c0_11, %c0_12], %13 {strides = array<i32>} : memref<2x128xf32, #tpu.memory_space<vmem>>, vector<2x128xf32>,
    return
  }
  func.func @transform_0(%arg0: i32) -> (i32, i32) {
    %c0_i32 = arith.constant 0 : i32
    %c0_i32_0 = arith.constant 0 : i32
    return %arg0, %c0_i32 : i32, i32
  }
  func.func @transform_1(%arg0: i32) -> (i32, i32) {
    %c0_i32 = arith.constant 0 : i32
    %c0_i32_0 = arith.constant 0 : i32
    %c0_i32_1 = arith.constant 0 : i32
    return %c0_i32, %c0_i32_0 : i32, i32
  }
  func.func @transform_2(%arg0: i32) -> (i32, i32) {
    %c0_i32 = arith.constant 0 : i32
    %c0_i32_0 = arith.constant 0 : i32
    %c0_i32_1 = arith.constant 0 : i32
    return %c0_i32, %c0_i32_0 : i32, i32
  }
  func.func @transform_3(%arg0: i32) -> (i32, i32) {
    %c0_i32 = arith.constant 0 : i32
    %c0_i32_0 = arith.constant 0 : i32
    %c0_i32_1 = arith.constant 0 : i32
    return %c0_i32, %c0_i32_0 : i32, i32
  }
  func.func @transform_4(%arg0: i32) -> (i32, i32) {
    %c0_i32 = arith.constant 0 : i32
    %c0_i32_0 = arith.constant 0 : i32
    %c0_i32_1 = arith.constant 0 : i32
    return %c0_i32, %c0_i32_0 : i32, i32
  }
  func.func @transform_5(%arg0: i32) -> (i32, i32) {
    %c0_i32 = arith.constant 0 : i32
    %c0_i32_0 = arith.constant 0 : i32
    return %arg0, %c0_i32 : i32, i32
  }
}

</mosaic_0001>

<llo_original>
// kernel: atari_dqn_forward.4
$region0: #{atari_dqn_forward.4}
  #allocation0 [shape = 'u32[]', space=smem, size = 0x4, offset = 0x4, fixed_abs, tag = 'smem constant byte address 0x4 - core index']
  #allocation1 [shape = 'u32[144,128]{1,0:T(1,128)}', space=vmem, size = 0x12000, scoped, tag = 'internal scratch']
  %s0 = inlined_call_operand.vmem [shape: bf16[200,256], index: 0, kind: input, shape index: {}]
  %s1 = inlined_call_operand.vmem [shape: bf16[256,128], index: 1, kind: input, shape index: {}]
  %s2 = inlined_call_operand.vmem [shape: f32[1,128], index: 2, kind: input, shape index: {}]
  %s3 = inlined_call_operand.vmem [shape: bf16[200,128], index: 3, kind: output, shape index: {}]
  %s4 = sld [smem:[#allocation0]]
  $region22: #{atari_dqn_forward.4} parent=0
    _
  %s6 = ssub.s32 1, %s4
  %s7 = scalar_select 0, %s6, %s4
  // Predicated region
  $region2: #{atari_dqn_forward.4} parent=0 // pred_check
    _
  $region3: #{atari_dqn_forward.4} parent=0 // pred_check_branch
    %9 = sbr.rel (0) target = $region5
  $region4: #{atari_dqn_forward.4} parent=0 // pred_region
    _
  $region5: #{atari_dqn_forward.4} parent=0 // pred_fallthru
    _
  // Predicated region
  $region6: #{atari_dqn_forward.4} parent=0 // pred_check
    _
  $region7: #{atari_dqn_forward.4} parent=0 // pred_check_branch
    %11 = sbr.rel (0) target = $region9
  $region8: #{atari_dqn_forward.4} parent=0 // pred_region
    _
  $region9: #{atari_dqn_forward.4} parent=0 // pred_fallthru
    _
  // Predicated region
  $region10: #{atari_dqn_forward.4} parent=0 // pred_check
    _
  $region11: #{atari_dqn_forward.4} parent=0 // pred_check_branch
    %13 = sbr.rel (0) target = $region13
  $region12: #{atari_dqn_forward.4} parent=0 // pred_region
    _
  $region13: #{atari_dqn_forward.4} parent=0 // pred_fallthru
    _
  %v15 = vld [vmem:[%s0] sm:$0xff]
  %v16 = vld [vmem:[%s0 + $0x8] sm:$0xff]
  %v17 = vld [vmem:[%s0 + $0x10] sm:$0xff]
  %v18 = vld [vmem:[%s0 + $0x18] sm:$0xff]
  %v19 = vld [vmem:[%s0 + $0x20] sm:$0xff]
  %v20 = vld [vmem:[%s0 + $0x28] sm:$0xff]
  %v21 = vld [vmem:[%s0 + $0x30] sm:$0xff]
  %v22 = vld [vmem:[%s0 + $0x38] sm:$0xff]
  %v23 = vld [vmem:[%s0 + $0x40] sm:$0xff]
  %v24 = vld [vmem:[%s0 + $0x48] sm:$0xff]
  %v25 = vld [vmem:[%s0 + $0x50] sm:$0xff]
  %v26 = vld [vmem:[%s0 + $0x58] sm:$0xff]
  %v27 = vld [vmem:[%s0 + $0x60] sm:$0xff]
  %v28 = vld [vmem:[%s0 + $0x68] sm:$0xff]
  %v29 = vld [vmem:[%s0 + $0x70] sm:$0xff]
  %v30 = vld [vmem:[%s0 + $0x78] sm:$0xff]
  %v31 = vld [vmem:[%s0 + $0x80] sm:$0xff]
  %v32 = vld [vmem:[%s0 + $0x88] sm:$0xff]
  %v33 = vld [vmem:[%s0 + $0x90] sm:$0xff]
  %v34 = vld [vmem:[%s0 + $0x98] sm:$0xff]
  %v35 = vld [vmem:[%s0 + $0xa0] sm:$0xff]
  %v36 = vld [vmem:[%s0 + $0xa8] sm:$0xff]
  %v37 = vld [vmem:[%s0 + $0xb0] sm:$0xff]
  %v38 = vld [vmem:[%s0 + $0xb8] sm:$0xff]
  %v39 = vld [vmem:[%s0 + $0xc0] sm:$0xff]
  %v40 = vld [vmem:[%s1] sm:$0xf]
  %v41 = vld [vmem:[%s1 + $0x4] sm:$0xf]
  %v42 = vld [vmem:[%s1 + $0x8] sm:$0xf]
  %v43 = vld [vmem:[%s1 + $0xc] sm:$0xf]
  %v44 = vld [vmem:[%s1 + $0x10] sm:$0xf]
  %v45 = vld [vmem:[%s1 + $0x14] sm:$0xf]
  %v46 = vld [vmem:[%s1 + $0x18] sm:$0xf]
  %v47 = vld [vmem:[%s1 + $0x1c] sm:$0xf]
  %v48 = vld [vmem:[%s1 + $0x20] sm:$0xf]
  %v49 = vld [vmem:[%s1 + $0x24] sm:$0xf]
  %v50 = vld [vmem:[%s1 + $0x28] sm:$0xf]
  %v51 = vld [vmem:[%s1 + $0x2c] sm:$0xf]
  %v52 = vld [vmem:[%s1 + $0x30] sm:$0xf]
  %v53 = vld [vmem:[%s1 + $0x34] sm:$0xf]
  %v54 = vld [vmem:[%s1 + $0x38] sm:$0xf]
  %v55 = vld [vmem:[%s1 + $0x3c] sm:$0xf]
  %v56 = vld [vmem:[%s1 + $0x40] sm:$0xf]
  %v57 = vld [vmem:[%s1 + $0x44] sm:$0xf]
  %v58 = vld [vmem:[%s1 + $0x48] sm:$0xf]
  %v59 = vld [vmem:[%s1 + $0x4c] sm:$0xf]
  %v60 = vld [vmem:[%s1 + $0x50] sm:$0xf]
  %v61 = vld [vmem:[%s1 + $0x54] sm:$0xf]
  %v62 = vld [vmem:[%s1 + $0x58] sm:$0xf]
  %v63 = vld [vmem:[%s1 + $0x5c] sm:$0xf]
  %v64 = vld [vmem:[%s1 + $0x60] sm:$0xf]
  %v65 = vld [vmem:[%s1 + $0x64] sm:$0xf]
  %v66 = vld [vmem:[%s1 + $0x68] sm:$0xf]
  %v67 = vld [vmem:[%s1 + $0x6c] sm:$0xf]
  %v68 = vld [vmem:[%s1 + $0x70] sm:$0xf]
  %v69 = vld [vmem:[%s1 + $0x74] sm:$0xf]
  %v70 = vld [vmem:[%s1 + $0x78] sm:$0xf]
  %v71 = vld [vmem:[%s1 + $0x7c] sm:$0xf]
  %v72 = vld [vmem:[%s2] sm:$0x1]
  %v74 = vlaneseq
  %v75 = vshrl.u32 %v74, 7
  %v76 = vsub.s32 0, %v75
  %v77 = vrot.slane %v72, %v76
  %v104 = vunpack.c.l.b16 %v15
  %v105 = vunpack.c.h.b16 %v15
  %v106 = vunpack.c.l.b16 %v16
  %v107 = vunpack.c.h.b16 %v16
  %v108 = vunpack.c.l.b16 %v17
  %v109 = vunpack.c.h.b16 %v17
  %v110 = vunpack.c.l.b16 %v18
  %v111 = vunpack.c.h.b16 %v18
  %v112 = vunpack.c.l.b16 %v19
  %v113 = vunpack.c.h.b16 %v19
  %v114 = vunpack.c.l.b16 %v20
  %v115 = vunpack.c.h.b16 %v20
  %v116 = vunpack.c.l.b16 %v21
  %v117 = vunpack.c.h.b16 %v21
  %v118 = vunpack.c.l.b16 %v22
  %v119 = vunpack.c.h.b16 %v22
  %v120 = vunpack.c.l.b16 %v23
  %v121 = vunpack.c.h.b16 %v23
  %v122 = vunpack.c.l.b16 %v24
  %v123 = vunpack.c.h.b16 %v24
  %v124 = vunpack.c.l.b16 %v25
  %v125 = vunpack.c.h.b16 %v25
  %v126 = vunpack.c.l.b16 %v26
  %v127 = vunpack.c.h.b16 %v26
  %v128 = vunpack.c.l.b16 %v27
  %v129 = vunpack.c.h.b16 %v27
  %v130 = vunpack.c.l.b16 %v28
  %v131 = vunpack.c.h.b16 %v28
  %v132 = vunpack.c.l.b16 %v29
  %v133 = vunpack.c.h.b16 %v29
  %v134 = vunpack.c.l.b16 %v30
  %v135 = vunpack.c.h.b16 %v30
  %v136 = vunpack.c.l.b16 %v31
  %v137 = vunpack.c.h.b16 %v31
  %v138 = vunpack.c.l.b16 %v32
  %v139 = vunpack.c.h.b16 %v32
  %v140 = vunpack.c.l.b16 %v33
  %v141 = vunpack.c.h.b16 %v33
  %v142 = vunpack.c.l.b16 %v34
  %v143 = vunpack.c.h.b16 %v34
  %v144 = vunpack.c.l.b16 %v35
  %v145 = vunpack.c.h.b16 %v35
  %v146 = vunpack.c.l.b16 %v36
  %v147 = vunpack.c.h.b16 %v36
  %v148 = vunpack.c.l.b16 %v37
  %v149 = vunpack.c.h.b16 %v37
  %v150 = vunpack.c.l.b16 %v38
  %v151 = vunpack.c.h.b16 %v38
  %v152 = vunpack.c.l.b16 %v39
  %v153 = vunpack.c.h.b16 %v39
  %v154 = vpack.c.b16 %v106, %v104
  %v155 = vpack.c.b16 %v107, %v105
  %v156 = vpack.c.b16 %v110, %v108
  %v157 = vpack.c.b16 %v111, %v109
  %v158 = vpack.c.b16 %v114, %v112
  %v159 = vpack.c.b16 %v115, %v113
  %v160 = vpack.c.b16 %v118, %v116
  %v161 = vpack.c.b16 %v119, %v117
  %v162 = vpack.c.b16 %v122, %v120
  %v163 = vpack.c.b16 %v123, %v121
  %v164 = vpack.c.b16 %v126, %v124
  %v165 = vpack.c.b16 %v127, %v125
  %v166 = vpack.c.b16 %v130, %v128
  %v167 = vpack.c.b16 %v131, %v129
  %v168 = vpack.c.b16 %v134, %v132
  %v169 = vpack.c.b16 %v135, %v133
  %v170 = vpack.c.b16 %v138, %v136
  %v171 = vpack.c.b16 %v139, %v137
  %v172 = vpack.c.b16 %v142, %v140
  %v173 = vpack.c.b16 %v143, %v141
  %v174 = vpack.c.b16 %v146, %v144
  %v175 = vpack.c.b16 %v147, %v145
  %v176 = vpack.c.b16 %v150, %v148
  %v177 = vpack.c.b16 %v151, %v149
  %v178 = vpack.c.b16 %v152, %v152
  %v179 = vpack.c.b16 %v153, %v153
  %v238 = vunpack.c.l.b16 %v40
  %v239 = vunpack.c.l.b16 %v41
  %v240 = vunpack.c.l.b16 %v42
  %v241 = vunpack.c.l.b16 %v43
  %v242 = vunpack.c.l.b16 %v44
  %v243 = vunpack.c.l.b16 %v45
  %v244 = vunpack.c.l.b16 %v46
  %v245 = vunpack.c.l.b16 %v47
  %v246 = vunpack.c.l.b16 %v48
  %v247 = vunpack.c.l.b16 %v49
  %v248 = vunpack.c.l.b16 %v50
  %v249 = vunpack.c.l.b16 %v51
  %v250 = vunpack.c.l.b16 %v52
  %v251 = vunpack.c.l.b16 %v53
  %v252 = vunpack.c.l.b16 %v54
  %v253 = vunpack.c.l.b16 %v55
  %v254 = vunpack.c.l.b16 %v56
  %v255 = vunpack.c.l.b16 %v57
  %v256 = vunpack.c.l.b16 %v58
  %v257 = vunpack.c.l.b16 %v59
  %v258 = vunpack.c.l.b16 %v60
  %v259 = vunpack.c.l.b16 %v61
  %v260 = vunpack.c.l.b16 %v62
  %v261 = vunpack.c.l.b16 %v63
  %v262 = vunpack.c.l.b16 %v64
  %v263 = vunpack.c.l.b16 %v65
  %v264 = vunpack.c.l.b16 %v66
  %v265 = vunpack.c.l.b16 %v67
  %v266 = vunpack.c.l.b16 %v68
  %v267 = vunpack.c.l.b16 %v69
  %v268 = vunpack.c.l.b16 %v70
  %v269 = vunpack.c.l.b16 %v71
  %v270 = vpack.c.b16 %v239, %v238
  %v271 = vpack.c.b16 %v241, %v240
  %v272 = vpack.c.b16 %v243, %v242
  %v273 = vpack.c.b16 %v245, %v244
  %v274 = vpack.c.b16 %v247, %v246
  %v275 = vpack.c.b16 %v249, %v248
  %v276 = vpack.c.b16 %v251, %v250
  %v277 = vpack.c.b16 %v253, %v252
  %v278 = vpack.c.b16 %v255, %v254
  %v279 = vpack.c.b16 %v257, %v256
  %v280 = vpack.c.b16 %v259, %v258
  %v281 = vpack.c.b16 %v261, %v260
  %v282 = vpack.c.b16 %v263, %v262
  %v283 = vpack.c.b16 %v265, %v264
  %v284 = vpack.c.b16 %v267, %v266
  %v285 = vpack.c.b16 %v269, %v268
  %302 = vmatprep.subr.bf16.mxu0 0
  %303 = vmatpush1.bf16.msra.mxu0 %v277
  %304 = vmatprep.subr.bf16.mxu0 0
  %305 = vmatpush1.bf16.msra.mxu0 %v276
  %306 = vmatprep.subr.bf16.mxu0 0
  %307 = vmatpush1.bf16.msra.mxu0 %v275
  %308 = vmatprep.subr.bf16.mxu0 0
  %309 = vmatpush1.bf16.msra.mxu0 %v274
  %310 = vmatprep.subr.bf16.mxu0 0
  %311 = vmatpush1.bf16.msra.mxu0 %v273
  %312 = vmatprep.subr.bf16.mxu0 0
  %313 = vmatpush1.bf16.msra.mxu0 %v272
  %314 = vmatprep.subr.bf16.mxu0 0
  %315 = vmatpush1.bf16.msra.mxu0 %v271
  %316 = vmatprep.subr.bf16.mxu0 0
  %317 = vmatpush1.bf16.msra.mxu0 %v270
  %318 = vmatprep.subr.bf16.mxu0 0
  %319 = vmatpush2.bf16.msra.mxu0 %v285
  %320 = vmatprep.subr.bf16.mxu0 0
  %321 = vmatpush2.bf16.msra.mxu0 %v284
  %322 = vmatprep.subr.bf16.mxu0 0
  %323 = vmatpush2.bf16.msra.mxu0 %v283
  %324 = vmatprep.subr.bf16.mxu0 0
  %325 = vmatpush2.bf16.msra.mxu0 %v282
  %326 = vmatprep.subr.bf16.mxu0 0
  %327 = vmatpush2.bf16.msra.mxu0 %v281
  %328 = vmatprep.subr.bf16.mxu0 0
  %329 = vmatpush2.bf16.msra.mxu0 %v280
  %330 = vmatprep.subr.bf16.mxu0 0
  %331 = vmatpush2.bf16.msra.mxu0 %v279
  %332 = vmatprep.subr.bf16.mxu0 0
  %333 = vmatpush2.bf16.msra.mxu0 %v278
  %334 = vmatprep.mubr.bf16.mxu0 %v155
  %335 = vmatmul.mubr.bf16.gmra.mxu0 %v154
  %v336 = vpop.f32.mrf.mxu0
  %v337 = vadd.f32 %v77, %v336
  %v338 = vpop.f32.mrf.mxu0
  %v339 = vpop.f32.mrf.mxu0
  %v340 = vadd.f32 %v77, %v339
  %v341 = vpop.f32.mrf.mxu0
  %342 = vmatprep.mubr.bf16.mxu0 %v157
  %343 = vmatmul.mubr.bf16.gmra.mxu0 %v156
  %v344 = vpop.f32.mrf.mxu0
  %v345 = vadd.f32 %v77, %v344
  %v346 = vpop.f32.mrf.mxu0
  %v347 = vpop.f32.mrf.mxu0
  %v348 = vadd.f32 %v77, %v347
  %v349 = vpop.f32.mrf.mxu0
  %350 = vmatprep.mubr.bf16.mxu0 %v159
  %351 = vmatmul.mubr.bf16.gmra.mxu0 %v158
  %v352 = vpop.f32.mrf.mxu0
  %v353 = vadd.f32 %v77, %v352
  %v354 = vpop.f32.mrf.mxu0
  %v355 = vpop.f32.mrf.mxu0
  %v356 = vadd.f32 %v77, %v355
  %v357 = vpop.f32.mrf.mxu0
  %358 = vmatprep.mubr.bf16.mxu0 %v161
  %359 = vmatmul.mubr.bf16.gmra.mxu0 %v160
  %v360 = vpop.f32.mrf.mxu0
  %v361 = vadd.f32 %v77, %v360
  %v362 = vpop.f32.mrf.mxu0
  %v363 = vpop.f32.mrf.mxu0
  %v364 = vadd.f32 %v77, %v363
  %v365 = vpop.f32.mrf.mxu0
  %366 = vmatprep.mubr.bf16.mxu0 %v163
  %367 = vmatmul.mubr.bf16.gmra.mxu0 %v162
  %v368 = vpop.f32.mrf.mxu0
  %v369 = vadd.f32 %v77, %v368
  %v370 = vpop.f32.mrf.mxu0
  %v371 = vpop.f32.mrf.mxu0
  %v372 = vadd.f32 %v77, %v371
  %v373 = vpop.f32.mrf.mxu0
  %374 = vmatprep.mubr.bf16.mxu0 %v165
  %375 = vmatmul.mubr.bf16.gmra.mxu0 %v164
  %v376 = vpop.f32.mrf.mxu0
  %v377 = vadd.f32 %v77, %v376
  %v378 = vpop.f32.mrf.mxu0
  %v379 = vpop.f32.mrf.mxu0
  %v380 = vadd.f32 %v77, %v379
  %v381 = vpop.f32.mrf.mxu0
  %382 = vmatprep.mubr.bf16.mxu0 %v167
  %383 = vmatmul.mubr.bf16.gmra.mxu0 %v166
  %v384 = vpop.f32.mrf.mxu0
  %v385 = vadd.f32 %v77, %v384
  %v386 = vpop.f32.mrf.mxu0
  %v387 = vpop.f32.mrf.mxu0
  %v388 = vadd.f32 %v77, %v387
  %v389 = vpop.f32.mrf.mxu0
  %390 = vmatprep.mubr.bf16.mxu0 %v169
  %391 = vmatmul.mubr.bf16.gmra.mxu0 %v168
  %v392 = vpop.f32.mrf.mxu0
  %v393 = vadd.f32 %v77, %v392
  %v394 = vpop.f32.mrf.mxu0
  %v395 = vpop.f32.mrf.mxu0
  %v396 = vadd.f32 %v77, %v395
  %v397 = vpop.f32.mrf.mxu0
  %398 = vmatprep.mubr.bf16.mxu0 %v171
  %399 = vmatmul.mubr.bf16.gmra.mxu0 %v170
  %v400 = vpop.f32.mrf.mxu0
  %v401 = vadd.f32 %v77, %v400
  %v402 = vpop.f32.mrf.mxu0
  %v403 = vpop.f32.mrf.mxu0
  %v404 = vadd.f32 %v77, %v403
  %v405 = vpop.f32.mrf.mxu0
  %406 = vmatprep.mubr.bf16.mxu0 %v173
  %407 = vmatmul.mubr.bf16.gmra.mxu0 %v172
  %v408 = vpop.f32.mrf.mxu0
  %v409 = vadd.f32 %v77, %v408
  %v410 = vpop.f32.mrf.mxu0
  %v411 = vpop.f32.mrf.mxu0
  %v412 = vadd.f32 %v77, %v411
  %v413 = vpop.f32.mrf.mxu0
  %414 = vmatprep.mubr.bf16.mxu0 %v175
  %415 = vmatmul.mubr.bf16.gmra.mxu0 %v174
  %v416 = vpop.f32.mrf.mxu0
  %v417 = vadd.f32 %v77, %v416
  %v418 = vpop.f32.mrf.mxu0
  %v419 = vpop.f32.mrf.mxu0
  %v420 = vadd.f32 %v77, %v419
  %v421 = vpop.f32.mrf.mxu0
  %422 = vmatprep.mubr.bf16.mxu0 %v177
  %423 = vmatmul.mubr.bf16.gmra.mxu0 %v176
  %v424 = vpop.f32.mrf.mxu0
  %v425 = vadd.f32 %v77, %v424
  %v426 = vpop.f32.mrf.mxu0
  %v427 = vpop.f32.mrf.mxu0
  %v428 = vadd.f32 %v77, %v427
  %v429 = vpop.f32.mrf.mxu0
  %430 = vmatprep.mubr.bf16.mxu0 %v179
  %431 = vmatmul.mubr.bf16.gmra.mxu0 %v178
  %v432 = vpop.f32.mrf.mxu0
  %v433 = vadd.f32 %v77, %v432
  %v434 = vpop.f32.mrf.mxu0
  %v435 = vpop.f32.mrf.mxu0
  %v436 = vpop.f32.mrf.mxu0
  %437 = vdwg.mxu0
  %v438 = vmax.f32 %v337, 0.0
  %v439 = vmax.f32 %v340, 0.0
  %v440 = vmax.f32 %v345, 0.0
  %v441 = vmax.f32 %v348, 0.0
  %v442 = vmax.f32 %v353, 0.0
  %v443 = vmax.f32 %v356, 0.0
  %v444 = vmax.f32 %v361, 0.0
  %v445 = vmax.f32 %v364, 0.0
  %v446 = vmax.f32 %v369, 0.0
  %v447 = vmax.f32 %v372, 0.0
  %v448 = vmax.f32 %v377, 0.0
  %v449 = vmax.f32 %v380, 0.0
  %v450 = vmax.f32 %v385, 0.0
  %v451 = vmax.f32 %v388, 0.0
  %v452 = vmax.f32 %v393, 0.0
  %v453 = vmax.f32 %v396, 0.0
  %v454 = vmax.f32 %v401, 0.0
  %v455 = vmax.f32 %v404, 0.0
  %v456 = vmax.f32 %v409, 0.0
  %v457 = vmax.f32 %v412, 0.0
  %v458 = vmax.f32 %v417, 0.0
  %v459 = vmax.f32 %v420, 0.0
  %v460 = vmax.f32 %v425, 0.0
  %v461 = vmax.f32 %v428, 0.0
  %v462 = vmax.f32 %v433, 0.0
  %v463 = vpack.c.bf16 %v439, %v438
  %v464 = vpack.c.bf16 %v441, %v440
  %v465 = vpack.c.bf16 %v443, %v442
  %v466 = vpack.c.bf16 %v445, %v444
  %v467 = vpack.c.bf16 %v447, %v446
  %v468 = vpack.c.bf16 %v449, %v448
  %v469 = vpack.c.bf16 %v451, %v450
  %v470 = vpack.c.bf16 %v453, %v452
  %v471 = vpack.c.bf16 %v455, %v454
  %v472 = vpack.c.bf16 %v457, %v456
  %v473 = vpack.c.bf16 %v459, %v458
  %v474 = vpack.c.bf16 %v461, %v460
  %v475 = vpack.c.bf16 %v462, %v462
  %v489 = vunpack.c.l.b16 %v463
  %v490 = vunpack.c.h.b16 %v463
  %v491 = vunpack.c.l.b16 %v464
  %v492 = vunpack.c.h.b16 %v464
  %v493 = vunpack.c.l.b16 %v465
  %v494 = vunpack.c.h.b16 %v465
  %v495 = vunpack.c.l.b16 %v466
  %v496 = vunpack.c.h.b16 %v466
  %v497 = vunpack.c.l.b16 %v467
  %v498 = vunpack.c.h.b16 %v467
  %v499 = vunpack.c.l.b16 %v468
  %v500 = vunpack.c.h.b16 %v468
  %v501 = vunpack.c.l.b16 %v469
  %v502 = vunpack.c.h.b16 %v469
  %v503 = vunpack.c.l.b16 %v470
  %v504 = vunpack.c.h.b16 %v470
  %v505 = vunpack.c.l.b16 %v471
  %v506 = vunpack.c.h.b16 %v471
  %v507 = vunpack.c.l.b16 %v472
  %v508 = vunpack.c.h.b16 %v472
  %v509 = vunpack.c.l.b16 %v473
  %v510 = vunpack.c.h.b16 %v473
  %v511 = vunpack.c.l.b16 %v474
  %v512 = vunpack.c.h.b16 %v474
  %v513 = vunpack.c.l.b16 %v475
  %v514 = vpack.c.b16 %v489, %v489
  %v515 = vpack.c.b16 %v490, %v490
  %v516 = vpack.c.b16 %v491, %v491
  %v517 = vpack.c.b16 %v492, %v492
  %v518 = vpack.c.b16 %v493, %v493
  %v519 = vpack.c.b16 %v494, %v494
  %v520 = vpack.c.b16 %v495, %v495
  %v521 = vpack.c.b16 %v496, %v496
  %v522 = vpack.c.b16 %v497, %v497
  %v523 = vpack.c.b16 %v498, %v498
  %v524 = vpack.c.b16 %v499, %v499
  %v525 = vpack.c.b16 %v500, %v500
  %v526 = vpack.c.b16 %v501, %v501
  %v527 = vpack.c.b16 %v502, %v502
  %v528 = vpack.c.b16 %v503, %v503
  %v529 = vpack.c.b16 %v504, %v504
  %v530 = vpack.c.b16 %v505, %v505
  %v531 = vpack.c.b16 %v506, %v506
  %v532 = vpack.c.b16 %v507, %v507
  %v533 = vpack.c.b16 %v508, %v508
  %v534 = vpack.c.b16 %v509, %v509
  %v535 = vpack.c.b16 %v510, %v510
  %v536 = vpack.c.b16 %v511, %v511
  %v537 = vpack.c.b16 %v512, %v512
  %v538 = vpack.c.b16 %v513, %v513
  %564 = vst [vmem:[%s3] sm:$0xf] %v514
  %565 = vst [vmem:[%s3 + $0x4] sm:$0xf] %v515
  %566 = vst [vmem:[%s3 + $0x8] sm:$0xf] %v516
  %567 = vst [vmem:[%s3 + $0xc] sm:$0xf] %v517
  %568 = vst [vmem:[%s3 + $0x10] sm:$0xf] %v518
  %569 = vst [vmem:[%s3 + $0x14] sm:$0xf] %v519
  %570 = vst [vmem:[%s3 + $0x18] sm:$0xf] %v520
  %571 = vst [vmem:[%s3 + $0x1c] sm:$0xf] %v521
  %572 = vst [vmem:[%s3 + $0x20] sm:$0xf] %v522
  %573 = vst [vmem:[%s3 + $0x24] sm:$0xf] %v523
  %574 = vst [vmem:[%s3 + $0x28] sm:$0xf] %v524
  %575 = vst [vmem:[%s3 + $0x2c] sm:$0xf] %v525
  %576 = vst [vmem:[%s3 + $0x30] sm:$0xf] %v526
  %577 = vst [vmem:[%s3 + $0x34] sm:$0xf] %v527
  %578 = vst [vmem:[%s3 + $0x38] sm:$0xf] %v528
  %579 = vst [vmem:[%s3 + $0x3c] sm:$0xf] %v529
  %580 = vst [vmem:[%s3 + $0x40] sm:$0xf] %v530
  %581 = vst [vmem:[%s3 + $0x44] sm:$0xf] %v531
  %582 = vst [vmem:[%s3 + $0x48] sm:$0xf] %v532
  %583 = vst [vmem:[%s3 + $0x4c] sm:$0xf] %v533
  %584 = vst [vmem:[%s3 + $0x50] sm:$0xf] %v534
  %585 = vst [vmem:[%s3 + $0x54] sm:$0xf] %v535
  %586 = vst [vmem:[%s3 + $0x58] sm:$0xf] %v536
  %587 = vst [vmem:[%s3 + $0x5c] sm:$0xf] %v537
  %588 = vst [vmem:[%s3 + $0x60] sm:$0xf] %v538
  // Predicated region
  $region14: #{atari_dqn_forward.4} parent=0 // pred_check
    _
  $region15: #{atari_dqn_forward.4} parent=0 // pred_check_branch
    %590 = sbr.rel (0) target = $region17
  $region16: #{atari_dqn_forward.4} parent=0 // pred_region
    _
  $region17: #{atari_dqn_forward.4} parent=0 // pred_fallthru
    _
  // Predicated region
  $region18: #{atari_dqn_forward.4} parent=0 // pred_check
    _
  $region19: #{atari_dqn_forward.4} parent=0 // pred_check_branch
    %592 = sbr.rel (0) target = $region21
  $region20: #{atari_dqn_forward.4} parent=0 // pred_region
    _
  $region21: #{atari_dqn_forward.4} parent=0 // pred_fallthru
    _

// kernel: atari_dqn_forward.5
$region0: #{atari_dqn_forward.5}
  #allocation0 [shape = 'u32[]', space=smem, size = 0x4, offset = 0x4, fixed_abs, tag = 'smem constant byte address 0x4 - core index']
  #allocation1 [shape = 'u32[144,128]{1,0:T(1,128)}', space=vmem, size = 0x12000, scoped, tag = 'internal scratch']
  %s0 = inlined_call_operand.vmem [shape: bf16[32,512], index: 0, kind: input, shape index: {}]
  %s1 = inlined_call_operand.vmem [shape: bf16[512,128], index: 1, kind: input, shape index: {}]
  %s2 = inlined_call_operand.vmem [shape: f32[1,128], index: 2, kind: input, shape index: {}]
  %s3 = inlined_call_operand.vmem [shape: bf16[32,128], index: 3, kind: output, shape index: {}]
  %s4 = sld [smem:[#allocation0]]
  $region22: #{atari_dqn_forward.5} parent=0
    _
  %s6 = ssub.s32 1, %s4
  %s7 = scalar_select 0, %s6, %s4
  // Predicated region
  $region2: #{atari_dqn_forward.5} parent=0 // pred_check
    _
  $region3: #{atari_dqn_forward.5} parent=0 // pred_check_branch
    %9 = sbr.rel (0) target = $region5
  $region4: #{atari_dqn_forward.5} parent=0 // pred_region
    _
  $region5: #{atari_dqn_forward.5} parent=0 // pred_fallthru
    _
  // Predicated region
  $region6: #{atari_dqn_forward.5} parent=0 // pred_check
    _
  $region7: #{atari_dqn_forward.5} parent=0 // pred_check_branch
    %11 = sbr.rel (0) target = $region9
  $region8: #{atari_dqn_forward.5} parent=0 // pred_region
    _
  $region9: #{atari_dqn_forward.5} parent=0 // pred_fallthru
    _
  // Predicated region
  $region10: #{atari_dqn_forward.5} parent=0 // pred_check
    _
  $region11: #{atari_dqn_forward.5} parent=0 // pred_check_branch
    %13 = sbr.rel (0) target = $region13
  $region12: #{atari_dqn_forward.5} parent=0 // pred_region
    _
  $region13: #{atari_dqn_forward.5} parent=0 // pred_fallthru
    _
  %v15 = vld [vmem:[%s0] sm:$0xff]
  %v16 = vld [vmem:[%s0 + $0x8] sm:$0xff]
  %v17 = vld [vmem:[%s0 + $0x10] sm:$0xff]
  %v18 = vld [vmem:[%s0 + $0x18] sm:$0xff]
  %v19 = vld [vmem:[%s0 + $0x20] sm:$0xff]
  %v20 = vld [vmem:[%s0 + $0x28] sm:$0xff]
  %v21 = vld [vmem:[%s0 + $0x30] sm:$0xff]
  %v22 = vld [vmem:[%s0 + $0x38] sm:$0xff]
  %v23 = vld [vmem:[%s1] sm:$0xf]
  %v24 = vld [vmem:[%s1 + $0x4] sm:$0xf]
  %v25 = vld [vmem:[%s1 + $0x8] sm:$0xf]
  %v26 = vld [vmem:[%s1 + $0xc] sm:$0xf]
  %v27 = vld [vmem:[%s1 + $0x10] sm:$0xf]
  %v28 = vld [vmem:[%s1 + $0x14] sm:$0xf]
  %v29 = vld [vmem:[%s1 + $0x18] sm:$0xf]
  %v30 = vld [vmem:[%s1 + $0x1c] sm:$0xf]
  %v31 = vld [vmem:[%s1 + $0x20] sm:$0xf]
  %v32 = vld [vmem:[%s1 + $0x24] sm:$0xf]
  %v33 = vld [vmem:[%s1 + $0x28] sm:$0xf]
  %v34 = vld [vmem:[%s1 + $0x2c] sm:$0xf]
  %v35 = vld [vmem:[%s1 + $0x30] sm:$0xf]
  %v36 = vld [vmem:[%s1 + $0x34] sm:$0xf]
  %v37 = vld [vmem:[%s1 + $0x38] sm:$0xf]
  %v38 = vld [vmem:[%s1 + $0x3c] sm:$0xf]
  %v39 = vld [vmem:[%s1 + $0x40] sm:$0xf]
  %v40 = vld [vmem:[%s1 + $0x44] sm:$0xf]
  %v41 = vld [vmem:[%s1 + $0x48] sm:$0xf]
  %v42 = vld [vmem:[%s1 + $0x4c] sm:$0xf]
  %v43 = vld [vmem:[%s1 + $0x50] sm:$0xf]
  %v44 = vld [vmem:[%s1 + $0x54] sm:$0xf]
  %v45 = vld [vmem:[%s1 + $0x58] sm:$0xf]
  %v46 = vld [vmem:[%s1 + $0x5c] sm:$0xf]
  %v47 = vld [vmem:[%s1 + $0x60] sm:$0xf]
  %v48 = vld [vmem:[%s1 + $0x64] sm:$0xf]
  %v49 = vld [vmem:[%s1 + $0x68] sm:$0xf]
  %v50 = vld [vmem:[%s1 + $0x6c] sm:$0xf]
  %v51 = vld [vmem:[%s1 + $0x70] sm:$0xf]
  %v52 = vld [vmem:[%s1 + $0x74] sm:$0xf]
  %v53 = vld [vmem:[%s1 + $0x78] sm:$0xf]
  %v54 = vld [vmem:[%s1 + $0x7c] sm:$0xf]
  %v55 = vld [vmem:[%s1 + $0x80] sm:$0xf]
  %v56 = vld [vmem:[%s1 + $0x84] sm:$0xf]
  %v57 = vld [vmem:[%s1 + $0x88] sm:$0xf]
  %v58 = vld [vmem:[%s1 + $0x8c] sm:$0xf]
  %v59 = vld [vmem:[%s1 + $0x90] sm:$0xf]
  %v60 = vld [vmem:[%s1 + $0x94] sm:$0xf]
  %v61 = vld [vmem:[%s1 + $0x98] sm:$0xf]
  %v62 = vld [vmem:[%s1 + $0x9c] sm:$0xf]
  %v63 = vld [vmem:[%s1 + $0xa0] sm:$0xf]
  %v64 = vld [vmem:[%s1 + $0xa4] sm:$0xf]
  %v65 = vld [vmem:[%s1 + $0xa8] sm:$0xf]
  %v66 = vld [vmem:[%s1 + $0xac] sm:$0xf]
  %v67 = vld [vmem:[%s1 + $0xb0] sm:$0xf]
  %v68 = vld [vmem:[%s1 + $0xb4] sm:$0xf]
  %v69 = vld [vmem:[%s1 + $0xb8] sm:$0xf]
  %v70 = vld [vmem:[%s1 + $0xbc] sm:$0xf]
  %v71 = vld [vmem:[%s1 + $0xc0] sm:$0xf]
  %v72 = vld [vmem:[%s1 + $0xc4] sm:$0xf]
  %v73 = vld [vmem:[%s1 + $0xc8] sm:$0xf]
  %v74 = vld [vmem:[%s1 + $0xcc] sm:$0xf]
  %v75 = vld [vmem:[%s1 + $0xd0] sm:$0xf]
  %v76 = vld [vmem:[%s1 + $0xd4] sm:$0xf]
  %v77 = vld [vmem:[%s1 + $0xd8] sm:$0xf]
  %v78 = vld [vmem:[%s1 + $0xdc] sm:$0xf]
  %v79 = vld [vmem:[%s1 + $0xe0] sm:$0xf]
  %v80 = vld [vmem:[%s1 + $0xe4] sm:$0xf]
  %v81 = vld [vmem:[%s1 + $0xe8] sm:$0xf]
  %v82 = vld [vmem:[%s1 + $0xec] sm:$0xf]
  %v83 = vld [vmem:[%s1 + $0xf0] sm:$0xf]
  %v84 = vld [vmem:[%s1 + $0xf4] sm:$0xf]
  %v85 = vld [vmem:[%s1 + $0xf8] sm:$0xf]
  %v86 = vld [vmem:[%s1 + $0xfc] sm:$0xf]
  %v87 = vld [vmem:[%s2] sm:$0x1]
  %v89 = vlaneseq
  %v90 = vshrl.u32 %v89, 7
  %v91 = vsub.s32 0, %v90
  %v92 = vrot.slane %v87, %v91
  %v102 = vunpack.c.l.b16 %v15
  %v103 = vunpack.c.h.b16 %v15
  %v104 = vunpack.c.l.b16 %v16
  %v105 = vunpack.c.h.b16 %v16
  %v106 = vunpack.c.l.b16 %v17
  %v107 = vunpack.c.h.b16 %v17
  %v108 = vunpack.c.l.b16 %v18
  %v109 = vunpack.c.h.b16 %v18
  %v110 = vunpack.c.l.b16 %v19
  %v111 = vunpack.c.h.b16 %v19
  %v112 = vunpack.c.l.b16 %v20
  %v113 = vunpack.c.h.b16 %v20
  %v114 = vunpack.c.l.b16 %v21
  %v115 = vunpack.c.h.b16 %v21
  %v116 = vunpack.c.l.b16 %v22
  %v117 = vunpack.c.h.b16 %v22
  %v118 = vpack.c.b16 %v106, %v102
  %v119 = vpack.c.b16 %v107, %v103
  %v120 = vpack.c.b16 %v108, %v104
  %v121 = vpack.c.b16 %v109, %v105
  %v122 = vpack.c.b16 %v114, %v110
  %v123 = vpack.c.b16 %v115, %v111
  %v124 = vpack.c.b16 %v116, %v112
  %v125 = vpack.c.b16 %v117, %v113
  %v198 = vunpack.c.l.b16 %v23
  %v199 = vunpack.c.l.b16 %v24
  %v200 = vunpack.c.l.b16 %v25
  %v201 = vunpack.c.l.b16 %v26
  %v202 = vunpack.c.l.b16 %v27
  %v203 = vunpack.c.l.b16 %v28
  %v204 = vunpack.c.l.b16 %v29
  %v205 = vunpack.c.l.b16 %v30
  %v206 = vunpack.c.l.b16 %v31
  %v207 = vunpack.c.l.b16 %v32
  %v208 = vunpack.c.l.b16 %v33
  %v209 = vunpack.c.l.b16 %v34
  %v210 = vunpack.c.l.b16 %v35
  %v211 = vunpack.c.l.b16 %v36
  %v212 = vunpack.c.l.b16 %v37
  %v213 = vunpack.c.l.b16 %v38
  %v214 = vunpack.c.l.b16 %v39
  %v215 = vunpack.c.l.b16 %v40
  %v216 = vunpack.c.l.b16 %v41
  %v217 = vunpack.c.l.b16 %v42
  %v218 = vunpack.c.l.b16 %v43
  %v219 = vunpack.c.l.b16 %v44
  %v220 = vunpack.c.l.b16 %v45
  %v221 = vunpack.c.l.b16 %v46
  %v222 = vunpack.c.l.b16 %v47
  %v223 = vunpack.c.l.b16 %v48
  %v224 = vunpack.c.l.b16 %v49
  %v225 = vunpack.c.l.b16 %v50
  %v226 = vunpack.c.l.b16 %v51
  %v227 = vunpack.c.l.b16 %v52
  %v228 = vunpack.c.l.b16 %v53
  %v229 = vunpack.c.l.b16 %v54
  %v230 = vunpack.c.l.b16 %v55
  %v231 = vunpack.c.l.b16 %v56
  %v232 = vunpack.c.l.b16 %v57
  %v233 = vunpack.c.l.b16 %v58
  %v234 = vunpack.c.l.b16 %v59
  %v235 = vunpack.c.l.b16 %v60
  %v236 = vunpack.c.l.b16 %v61
  %v237 = vunpack.c.l.b16 %v62
  %v238 = vunpack.c.l.b16 %v63
  %v239 = vunpack.c.l.b16 %v64
  %v240 = vunpack.c.l.b16 %v65
  %v241 = vunpack.c.l.b16 %v66
  %v242 = vunpack.c.l.b16 %v67
  %v243 = vunpack.c.l.b16 %v68
  %v244 = vunpack.c.l.b16 %v69
  %v245 = vunpack.c.l.b16 %v70
  %v246 = vunpack.c.l.b16 %v71
  %v247 = vunpack.c.l.b16 %v72
  %v248 = vunpack.c.l.b16 %v73
  %v249 = vunpack.c.l.b16 %v74
  %v250 = vunpack.c.l.b16 %v75
  %v251 = vunpack.c.l.b16 %v76
  %v252 = vunpack.c.l.b16 %v77
  %v253 = vunpack.c.l.b16 %v78
  %v254 = vunpack.c.l.b16 %v79
  %v255 = vunpack.c.l.b16 %v80
  %v256 = vunpack.c.l.b16 %v81
  %v257 = vunpack.c.l.b16 %v82
  %v258 = vunpack.c.l.b16 %v83
  %v259 = vunpack.c.l.b16 %v84
  %v260 = vunpack.c.l.b16 %v85
  %v261 = vunpack.c.l.b16 %v86
  %v262 = vpack.c.b16 %v199, %v198
  %v263 = vpack.c.b16 %v201, %v200
  %v264 = vpack.c.b16 %v203, %v202
  %v265 = vpack.c.b16 %v205, %v204
  %v266 = vpack.c.b16 %v207, %v206
  %v267 = vpack.c.b16 %v209, %v208
  %v268 = vpack.c.b16 %v211, %v210
  %v269 = vpack.c.b16 %v213, %v212
  %v270 = vpack.c.b16 %v215, %v214
  %v271 = vpack.c.b16 %v217, %v216
  %v272 = vpack.c.b16 %v219, %v218
  %v273 = vpack.c.b16 %v221, %v220
  %v274 = vpack.c.b16 %v223, %v222
  %v275 = vpack.c.b16 %v225, %v224
  %v276 = vpack.c.b16 %v227, %v226
  %v277 = vpack.c.b16 %v229, %v228
  %v278 = vpack.c.b16 %v231, %v230
  %v279 = vpack.c.b16 %v233, %v232
  %v280 = vpack.c.b16 %v235, %v234
  %v281 = vpack.c.b16 %v237, %v236
  %v282 = vpack.c.b16 %v239, %v238
  %v283 = vpack.c.b16 %v241, %v240
  %v284 = vpack.c.b16 %v243, %v242
  %v285 = vpack.c.b16 %v245, %v244
  %v286 = vpack.c.b16 %v247, %v246
  %v287 = vpack.c.b16 %v249, %v248
  %v288 = vpack.c.b16 %v251, %v250
  %v289 = vpack.c.b16 %v253, %v252
  %v290 = vpack.c.b16 %v255, %v254
  %v291 = vpack.c.b16 %v257, %v256
  %v292 = vpack.c.b16 %v259, %v258
  %v293 = vpack.c.b16 %v261, %v260
  %326 = vmatprep.subr.bf16.mxu0 0
  %327 = vmatpush1.bf16.msra.mxu0 %v269
  %328 = vmatprep.subr.bf16.mxu0 0
  %329 = vmatpush1.bf16.msra.mxu0 %v268
  %330 = vmatprep.subr.bf16.mxu0 0
  %331 = vmatpush1.bf16.msra.mxu0 %v267
  %332 = vmatprep.subr.bf16.mxu0 0
  %333 = vmatpush1.bf16.msra.mxu0 %v266
  %334 = vmatprep.subr.bf16.mxu0 0
  %335 = vmatpush1.bf16.msra.mxu0 %v265
  %336 = vmatprep.subr.bf16.mxu0 0
  %337 = vmatpush1.bf16.msra.mxu0 %v264
  %338 = vmatprep.subr.bf16.mxu0 0
  %339 = vmatpush1.bf16.msra.mxu0 %v263
  %340 = vmatprep.subr.bf16.mxu0 0
  %341 = vmatpush1.bf16.msra.mxu0 %v262
  %342 = vmatprep.subr.bf16.mxu0 0
  %343 = vmatpush2.bf16.msra.mxu0 %v277
  %344 = vmatprep.subr.bf16.mxu0 0
  %345 = vmatpush2.bf16.msra.mxu0 %v276
  %346 = vmatprep.subr.bf16.mxu0 0
  %347 = vmatpush2.bf16.msra.mxu0 %v275
  %348 = vmatprep.subr.bf16.mxu0 0
  %349 = vmatpush2.bf16.msra.mxu0 %v274
  %350 = vmatprep.subr.bf16.mxu0 0
  %351 = vmatpush2.bf16.msra.mxu0 %v273
  %352 = vmatprep.subr.bf16.mxu0 0
  %353 = vmatpush2.bf16.msra.mxu0 %v272
  %354 = vmatprep.subr.bf16.mxu0 0
  %355 = vmatpush2.bf16.msra.mxu0 %v271
  %356 = vmatprep.subr.bf16.mxu0 0
  %357 = vmatpush2.bf16.msra.mxu0 %v270
  %358 = vmatprep.mubr.bf16.mxu0 %v119
  %359 = vmatmul.mubr.bf16.gmra.mxu0 %v118
  %v360 = vpop.f32.mrf.mxu0
  %v361 = vadd.f32 %v92, %v360
  %v362 = vpop.f32.mrf.mxu0
  %v363 = vpop.f32.mrf.mxu0
  %v364 = vadd.f32 %v92, %v363
  %v365 = vpop.f32.mrf.mxu0
  %366 = vmatprep.mubr.bf16.mxu0 %v123
  %367 = vmatmul.mubr.bf16.gmra.mxu0 %v122
  %v368 = vpop.f32.mrf.mxu0
  %v369 = vadd.f32 %v92, %v368
  %v370 = vpop.f32.mrf.mxu0
  %v371 = vpop.f32.mrf.mxu0
  %v372 = vadd.f32 %v92, %v371
  %v373 = vpop.f32.mrf.mxu0
  %374 = vdwg.mxu0
  %375 = vmatprep.subr.bf16.mxu0 0
  %376 = vmatpush1.bf16.msra.mxu0 %v285
  %377 = vmatprep.subr.bf16.mxu0 0
  %378 = vmatpush1.bf16.msra.mxu0 %v284
  %379 = vmatprep.subr.bf16.mxu0 0
  %380 = vmatpush1.bf16.msra.mxu0 %v283
  %381 = vmatprep.subr.bf16.mxu0 0
  %382 = vmatpush1.bf16.msra.mxu0 %v282
  %383 = vmatprep.subr.bf16.mxu0 0
  %384 = vmatpush1.bf16.msra.mxu0 %v281
  %385 = vmatprep.subr.bf16.mxu0 0
  %386 = vmatpush1.bf16.msra.mxu0 %v280
  %387 = vmatprep.subr.bf16.mxu0 0
  %388 = vmatpush1.bf16.msra.mxu0 %v279
  %389 = vmatprep.subr.bf16.mxu0 0
  %390 = vmatpush1.bf16.msra.mxu0 %v278
  %391 = vmatprep.subr.bf16.mxu0 0
  %392 = vmatpush2.bf16.msra.mxu0 %v293
  %393 = vmatprep.subr.bf16.mxu0 0
  %394 = vmatpush2.bf16.msra.mxu0 %v292
  %395 = vmatprep.subr.bf16.mxu0 0
  %396 = vmatpush2.bf16.msra.mxu0 %v291
  %397 = vmatprep.subr.bf16.mxu0 0
  %398 = vmatpush2.bf16.msra.mxu0 %v290
  %399 = vmatprep.subr.bf16.mxu0 0
  %400 = vmatpush2.bf16.msra.mxu0 %v289
  %401 = vmatprep.subr.bf16.mxu0 0
  %402 = vmatpush2.bf16.msra.mxu0 %v288
  %403 = vmatprep.subr.bf16.mxu0 0
  %404 = vmatpush2.bf16.msra.mxu0 %v287
  %405 = vmatprep.subr.bf16.mxu0 0
  %406 = vmatpush2.bf16.msra.mxu0 %v286
  %407 = vmatprep.mubr.bf16.mxu0 %v121
  %408 = vmatmul.mubr.bf16.gmra.mxu0 %v120
  %v409 = vpop.f32.mrf.mxu0
  %v410 = vadd.f32 %v361, %v409
  %v411 = vpop.f32.mrf.mxu0
  %v412 = vpop.f32.mrf.mxu0
  %v413 = vadd.f32 %v364, %v412
  %v414 = vpop.f32.mrf.mxu0
  %415 = vmatprep.mubr.bf16.mxu0 %v125
  %416 = vmatmul.mubr.bf16.gmra.mxu0 %v124
  %v417 = vpop.f32.mrf.mxu0
  %v418 = vadd.f32 %v369, %v417
  %v419 = vpop.f32.mrf.mxu0
  %v420 = vpop.f32.mrf.mxu0
  %v421 = vadd.f32 %v372, %v420
  %v422 = vpop.f32.mrf.mxu0
  %423 = vdwg.mxu0
  %v424 = vmax.f32 %v410, 0.0
  %v425 = vmax.f32 %v413, 0.0
  %v426 = vmax.f32 %v418, 0.0
  %v427 = vmax.f32 %v421, 0.0
  %v428 = vpack.c.bf16 %v425, %v424
  %v429 = vpack.c.bf16 %v427, %v426
  %v432 = vunpack.c.l.b16 %v428
  %v433 = vunpack.c.h.b16 %v428
  %v434 = vunpack.c.l.b16 %v429
  %v435 = vunpack.c.h.b16 %v429
  %v436 = vpack.c.b16 %v432, %v432
  %v437 = vpack.c.b16 %v433, %v433
  %v438 = vpack.c.b16 %v434, %v434
  %v439 = vpack.c.b16 %v435, %v435
  %444 = vst [vmem:[%s3] sm:$0xf] %v436
  %445 = vst [vmem:[%s3 + $0x4] sm:$0xf] %v437
  %446 = vst [vmem:[%s3 + $0x8] sm:$0xf] %v438
  %447 = vst [vmem:[%s3 + $0xc] sm:$0xf] %v439
  // Predicated region
  $region14: #{atari_dqn_forward.5} parent=0 // pred_check
    _
  $region15: #{atari_dqn_forward.5} parent=0 // pred_check_branch
    %449 = sbr.rel (0) target = $region17
  $region16: #{atari_dqn_forward.5} parent=0 // pred_region
    _
  $region17: #{atari_dqn_forward.5} parent=0 // pred_fallthru
    _
  // Predicated region
  $region18: #{atari_dqn_forward.5} parent=0 // pred_check
    _
  $region19: #{atari_dqn_forward.5} parent=0 // pred_check_branch
    %451 = sbr.rel (0) target = $region21
  $region20: #{atari_dqn_forward.5} parent=0 // pred_region
    _
  $region21: #{atari_dqn_forward.5} parent=0 // pred_fallthru
    _

// kernel: atari_dqn_forward.6
$region0: #{atari_dqn_forward.6}
  #allocation0 [shape = 'u32[]', space=smem, size = 0x4, offset = 0x4, fixed_abs, tag = 'smem constant byte address 0x4 - core index']
  #allocation1 [shape = 'u32[144,128]{1,0:T(1,128)}', space=vmem, size = 0x12000, scoped, tag = 'internal scratch']
  %s0 = inlined_call_operand.vmem [shape: bf16[8,576], index: 0, kind: input, shape index: {}]
  %s1 = inlined_call_operand.vmem [shape: bf16[576,128], index: 1, kind: input, shape index: {}]
  %s2 = inlined_call_operand.vmem [shape: f32[1,128], index: 2, kind: input, shape index: {}]
  %s3 = inlined_call_operand.vmem [shape: bf16[8,128], index: 3, kind: output, shape index: {}]
  %s4 = sld [smem:[#allocation0]]
  $region22: #{atari_dqn_forward.6} parent=0
    _
  %s6 = ssub.s32 1, %s4
  %s7 = scalar_select 0, %s6, %s4
  // Predicated region
  $region2: #{atari_dqn_forward.6} parent=0 // pred_check
    _
  $region3: #{atari_dqn_forward.6} parent=0 // pred_check_branch
    %9 = sbr.rel (0) target = $region5
  $region4: #{atari_dqn_forward.6} parent=0 // pred_region
    _
  $region5: #{atari_dqn_forward.6} parent=0 // pred_fallthru
    _
  // Predicated region
  $region6: #{atari_dqn_forward.6} parent=0 // pred_check
    _
  $region7: #{atari_dqn_forward.6} parent=0 // pred_check_branch
    %11 = sbr.rel (0) target = $region9
  $region8: #{atari_dqn_forward.6} parent=0 // pred_region
    _
  $region9: #{atari_dqn_forward.6} parent=0 // pred_fallthru
    _
  // Predicated region
  $region10: #{atari_dqn_forward.6} parent=0 // pred_check
    _
  $region11: #{atari_dqn_forward.6} parent=0 // pred_check_branch
    %13 = sbr.rel (0) target = $region13
  $region12: #{atari_dqn_forward.6} parent=0 // pred_region
    _
  $region13: #{atari_dqn_forward.6} parent=0 // pred_fallthru
    _
  %v15 = vld [vmem:[%s0] sm:$0xff]
  %v16 = vld [vmem:[%s0 + $0x8] sm:$0xff]
  %v17 = vld [vmem:[%s0 + $0x10] sm:$0xf]
  %v18 = vld [vmem:[%s1] sm:$0xf]
  %v19 = vld [vmem:[%s1 + $0x4] sm:$0xf]
  %v20 = vld [vmem:[%s1 + $0x8] sm:$0xf]
  %v21 = vld [vmem:[%s1 + $0xc] sm:$0xf]
  %v22 = vld [vmem:[%s1 + $0x10] sm:$0xf]
  %v23 = vld [vmem:[%s1 + $0x14] sm:$0xf]
  %v24 = vld [vmem:[%s1 + $0x18] sm:$0xf]
  %v25 = vld [vmem:[%s1 + $0x1c] sm:$0xf]
  %v26 = vld [vmem:[%s1 + $0x20] sm:$0xf]
  %v27 = vld [vmem:[%s1 + $0x24] sm:$0xf]
  %v28 = vld [vmem:[%s1 + $0x28] sm:$0xf]
  %v29 = vld [vmem:[%s1 + $0x2c] sm:$0xf]
  %v30 = vld [vmem:[%s1 + $0x30] sm:$0xf]
  %v31 = vld [vmem:[%s1 + $0x34] sm:$0xf]
  %v32 = vld [vmem:[%s1 + $0x38] sm:$0xf]
  %v33 = vld [vmem:[%s1 + $0x3c] sm:$0xf]
  %v34 = vld [vmem:[%s1 + $0x40] sm:$0xf]
  %v35 = vld [vmem:[%s1 + $0x44] sm:$0xf]
  %v36 = vld [vmem:[%s1 + $0x48] sm:$0xf]
  %v37 = vld [vmem:[%s1 + $0x4c] sm:$0xf]
  %v38 = vld [vmem:[%s1 + $0x50] sm:$0xf]
  %v39 = vld [vmem:[%s1 + $0x54] sm:$0xf]
  %v40 = vld [vmem:[%s1 + $0x58] sm:$0xf]
  %v41 = vld [vmem:[%s1 + $0x5c] sm:$0xf]
  %v42 = vld [vmem:[%s1 + $0x60] sm:$0xf]
  %v43 = vld [vmem:[%s1 + $0x64] sm:$0xf]
  %v44 = vld [vmem:[%s1 + $0x68] sm:$0xf]
  %v45 = vld [vmem:[%s1 + $0x6c] sm:$0xf]
  %v46 = vld [vmem:[%s1 + $0x70] sm:$0xf]
  %v47 = vld [vmem:[%s1 + $0x74] sm:$0xf]
  %v48 = vld [vmem:[%s1 + $0x78] sm:$0xf]
  %v49 = vld [vmem:[%s1 + $0x7c] sm:$0xf]
  %v50 = vld [vmem:[%s1 + $0x80] sm:$0xf]
  %v51 = vld [vmem:[%s1 + $0x84] sm:$0xf]
  %v52 = vld [vmem:[%s1 + $0x88] sm:$0xf]
  %v53 = vld [vmem:[%s1 + $0x8c] sm:$0xf]
  %v54 = vld [vmem:[%s1 + $0x90] sm:$0xf]
  %v55 = vld [vmem:[%s1 + $0x94] sm:$0xf]
  %v56 = vld [vmem:[%s1 + $0x98] sm:$0xf]
  %v57 = vld [vmem:[%s1 + $0x9c] sm:$0xf]
  %v58 = vld [vmem:[%s1 + $0xa0] sm:$0xf]
  %v59 = vld [vmem:[%s1 + $0xa4] sm:$0xf]
  %v60 = vld [vmem:[%s1 + $0xa8] sm:$0xf]
  %v61 = vld [vmem:[%s1 + $0xac] sm:$0xf]
  %v62 = vld [vmem:[%s1 + $0xb0] sm:$0xf]
  %v63 = vld [vmem:[%s1 + $0xb4] sm:$0xf]
  %v64 = vld [vmem:[%s1 + $0xb8] sm:$0xf]
  %v65 = vld [vmem:[%s1 + $0xbc] sm:$0xf]
  %v66 = vld [vmem:[%s1 + $0xc0] sm:$0xf]
  %v67 = vld [vmem:[%s1 + $0xc4] sm:$0xf]
  %v68 = vld [vmem:[%s1 + $0xc8] sm:$0xf]
  %v69 = vld [vmem:[%s1 + $0xcc] sm:$0xf]
  %v70 = vld [vmem:[%s1 + $0xd0] sm:$0xf]
  %v71 = vld [vmem:[%s1 + $0xd4] sm:$0xf]
  %v72 = vld [vmem:[%s1 + $0xd8] sm:$0xf]
  %v73 = vld [vmem:[%s1 + $0xdc] sm:$0xf]
  %v74 = vld [vmem:[%s1 + $0xe0] sm:$0xf]
  %v75 = vld [vmem:[%s1 + $0xe4] sm:$0xf]
  %v76 = vld [vmem:[%s1 + $0xe8] sm:$0xf]
  %v77 = vld [vmem:[%s1 + $0xec] sm:$0xf]
  %v78 = vld [vmem:[%s1 + $0xf0] sm:$0xf]
  %v79 = vld [vmem:[%s1 + $0xf4] sm:$0xf]
  %v80 = vld [vmem:[%s1 + $0xf8] sm:$0xf]
  %v81 = vld [vmem:[%s1 + $0xfc] sm:$0xf]
  %v82 = vld [vmem:[%s1 + $0x100] sm:$0xf]
  %v83 = vld [vmem:[%s1 + $0x104] sm:$0xf]
  %v84 = vld [vmem:[%s1 + $0x108] sm:$0xf]
  %v85 = vld [vmem:[%s1 + $0x10c] sm:$0xf]
  %v86 = vld [vmem:[%s1 + $0x110] sm:$0xf]
  %v87 = vld [vmem:[%s1 + $0x114] sm:$0xf]
  %v88 = vld [vmem:[%s1 + $0x118] sm:$0xf]
  %v89 = vld [vmem:[%s1 + $0x11c] sm:$0xf]
  %v90 = vld [vmem:[%s2] sm:$0x1]
  %v92 = vlaneseq
  %v93 = vshrl.u32 %v92, 7
  %v94 = vsub.s32 0, %v93
  %v95 = vrot.slane %v90, %v94
  %v100 = vunpack.c.l.b16 %v15
  %v101 = vunpack.c.h.b16 %v15
  %v102 = vunpack.c.l.b16 %v16
  %v103 = vunpack.c.h.b16 %v16
  %v104 = vunpack.c.l.b16 %v17
  %v105 = vpack.c.b16 %v100, %v100
  %v106 = vpack.c.b16 %v101, %v101
  %v107 = vpack.c.b16 %v102, %v102
  %v108 = vpack.c.b16 %v103, %v103
  %v109 = vpack.c.b16 %v104, %v104
  %v186 = vunpack.c.l.b16 %v18
  %v187 = vunpack.c.l.b16 %v19
  %v188 = vunpack.c.l.b16 %v20
  %v189 = vunpack.c.l.b16 %v21
  %v190 = vunpack.c.l.b16 %v22
  %v191 = vunpack.c.l.b16 %v23
  %v192 = vunpack.c.l.b16 %v24
  %v193 = vunpack.c.l.b16 %v25
  %v194 = vunpack.c.l.b16 %v26
  %v195 = vunpack.c.l.b16 %v27
  %v196 = vunpack.c.l.b16 %v28
  %v197 = vunpack.c.l.b16 %v29
  %v198 = vunpack.c.l.b16 %v30
  %v199 = vunpack.c.l.b16 %v31
  %v200 = vunpack.c.l.b16 %v32
  %v201 = vunpack.c.l.b16 %v33
  %v202 = vunpack.c.l.b16 %v34
  %v203 = vunpack.c.l.b16 %v35
  %v204 = vunpack.c.l.b16 %v36
  %v205 = vunpack.c.l.b16 %v37
  %v206 = vunpack.c.l.b16 %v38
  %v207 = vunpack.c.l.b16 %v39
  %v208 = vunpack.c.l.b16 %v40
  %v209 = vunpack.c.l.b16 %v41
  %v210 = vunpack.c.l.b16 %v42
  %v211 = vunpack.c.l.b16 %v43
  %v212 = vunpack.c.l.b16 %v44
  %v213 = vunpack.c.l.b16 %v45
  %v214 = vunpack.c.l.b16 %v46
  %v215 = vunpack.c.l.b16 %v47
  %v216 = vunpack.c.l.b16 %v48
  %v217 = vunpack.c.l.b16 %v49
  %v218 = vunpack.c.l.b16 %v50
  %v219 = vunpack.c.l.b16 %v51
  %v220 = vunpack.c.l.b16 %v52
  %v221 = vunpack.c.l.b16 %v53
  %v222 = vunpack.c.l.b16 %v54
  %v223 = vunpack.c.l.b16 %v55
  %v224 = vunpack.c.l.b16 %v56
  %v225 = vunpack.c.l.b16 %v57
  %v226 = vunpack.c.l.b16 %v58
  %v227 = vunpack.c.l.b16 %v59
  %v228 = vunpack.c.l.b16 %v60
  %v229 = vunpack.c.l.b16 %v61
  %v230 = vunpack.c.l.b16 %v62
  %v231 = vunpack.c.l.b16 %v63
  %v232 = vunpack.c.l.b16 %v64
  %v233 = vunpack.c.l.b16 %v65
  %v234 = vunpack.c.l.b16 %v66
  %v235 = vunpack.c.l.b16 %v67
  %v236 = vunpack.c.l.b16 %v68
  %v237 = vunpack.c.l.b16 %v69
  %v238 = vunpack.c.l.b16 %v70
  %v239 = vunpack.c.l.b16 %v71
  %v240 = vunpack.c.l.b16 %v72
  %v241 = vunpack.c.l.b16 %v73
  %v242 = vunpack.c.l.b16 %v74
  %v243 = vunpack.c.l.b16 %v75
  %v244 = vunpack.c.l.b16 %v76
  %v245 = vunpack.c.l.b16 %v77
  %v246 = vunpack.c.l.b16 %v78
  %v247 = vunpack.c.l.b16 %v79
  %v248 = vunpack.c.l.b16 %v80
  %v249 = vunpack.c.l.b16 %v81
  %v250 = vunpack.c.l.b16 %v82
  %v251 = vunpack.c.l.b16 %v83
  %v252 = vunpack.c.l.b16 %v84
  %v253 = vunpack.c.l.b16 %v85
  %v254 = vunpack.c.l.b16 %v86
  %v255 = vunpack.c.l.b16 %v87
  %v256 = vunpack.c.l.b16 %v88
  %v257 = vunpack.c.l.b16 %v89
  %v258 = vpack.c.b16 %v187, %v186
  %v259 = vpack.c.b16 %v189, %v188
  %v260 = vpack.c.b16 %v191, %v190
  %v261 = vpack.c.b16 %v193, %v192
  %v262 = vpack.c.b16 %v195, %v194
  %v263 = vpack.c.b16 %v197, %v196
  %v264 = vpack.c.b16 %v199, %v198
  %v265 = vpack.c.b16 %v201, %v200
  %v266 = vpack.c.b16 %v203, %v202
  %v267 = vpack.c.b16 %v205, %v204
  %v268 = vpack.c.b16 %v207, %v206
  %v269 = vpack.c.b16 %v209, %v208
  %v270 = vpack.c.b16 %v211, %v210
  %v271 = vpack.c.b16 %v213, %v212
  %v272 = vpack.c.b16 %v215, %v214
  %v273 = vpack.c.b16 %v217, %v216
  %v274 = vpack.c.b16 %v219, %v218
  %v275 = vpack.c.b16 %v221, %v220
  %v276 = vpack.c.b16 %v223, %v222
  %v277 = vpack.c.b16 %v225, %v224
  %v278 = vpack.c.b16 %v227, %v226
  %v279 = vpack.c.b16 %v229, %v228
  %v280 = vpack.c.b16 %v231, %v230
  %v281 = vpack.c.b16 %v233, %v232
  %v282 = vpack.c.b16 %v235, %v234
  %v283 = vpack.c.b16 %v237, %v236
  %v284 = vpack.c.b16 %v239, %v238
  %v285 = vpack.c.b16 %v241, %v240
  %v286 = vpack.c.b16 %v243, %v242
  %v287 = vpack.c.b16 %v245, %v244
  %v288 = vpack.c.b16 %v247, %v246
  %v289 = vpack.c.b16 %v249, %v248
  %v290 = vpack.c.b16 %v251, %v250
  %v291 = vpack.c.b16 %v253, %v252
  %v292 = vpack.c.b16 %v255, %v254
  %v293 = vpack.c.b16 %v257, %v256
  %vm330 = vcmask 523264
  %v332 = vsel %vm330, %v109, 0
  %334 = vmatprep.subr.bf16.mxu0 0
  %335 = vmatpush1.bf16.msra.mxu0 %v265
  %336 = vmatprep.subr.bf16.mxu0 0
  %337 = vmatpush1.bf16.msra.mxu0 %v264
  %338 = vmatprep.subr.bf16.mxu0 0
  %339 = vmatpush1.bf16.msra.mxu0 %v263
  %340 = vmatprep.subr.bf16.mxu0 0
  %341 = vmatpush1.bf16.msra.mxu0 %v262
  %342 = vmatprep.subr.bf16.mxu0 0
  %343 = vmatpush1.bf16.msra.mxu0 %v261
  %344 = vmatprep.subr.bf16.mxu0 0
  %345 = vmatpush1.bf16.msra.mxu0 %v260
  %346 = vmatprep.subr.bf16.mxu0 0
  %347 = vmatpush1.bf16.msra.mxu0 %v259
  %348 = vmatprep.subr.bf16.mxu0 0
  %349 = vmatpush1.bf16.msra.mxu0 %v258
  %350 = vmatprep.subr.bf16.mxu0 0
  %351 = vmatpush2.bf16.msra.mxu0 %v273
  %352 = vmatprep.subr.bf16.mxu0 0
  %353 = vmatpush2.bf16.msra.mxu0 %v272
  %354 = vmatprep.subr.bf16.mxu0 0
  %355 = vmatpush2.bf16.msra.mxu0 %v271
  %356 = vmatprep.subr.bf16.mxu0 0
  %357 = vmatpush2.bf16.msra.mxu0 %v270
  %358 = vmatprep.subr.bf16.mxu0 0
  %359 = vmatpush2.bf16.msra.mxu0 %v269
  %360 = vmatprep.subr.bf16.mxu0 0
  %361 = vmatpush2.bf16.msra.mxu0 %v268
  %362 = vmatprep.subr.bf16.mxu0 0
  %363 = vmatpush2.bf16.msra.mxu0 %v267
  %364 = vmatprep.subr.bf16.mxu0 0
  %365 = vmatpush2.bf16.msra.mxu0 %v266
  %366 = vmatprep.mubr.bf16.mxu0 %v106
  %367 = vmatmul.mubr.bf16.gmra.mxu0 %v105
  %v368 = vpop.f32.mrf.mxu0
  %v369 = vadd.f32 %v95, %v368
  %v370 = vpop.f32.mrf.mxu0
  %v371 = vpop.f32.mrf.mxu0
  %v372 = vpop.f32.mrf.mxu0
  %373 = vdwg.mxu0
  %374 = vmatprep.subr.bf16.mxu0 0
  %375 = vmatpush1.bf16.msra.mxu0 %v281
  %376 = vmatprep.subr.bf16.mxu0 0
  %377 = vmatpush1.bf16.msra.mxu0 %v280
  %378 = vmatprep.subr.bf16.mxu0 0
  %379 = vmatpush1.bf16.msra.mxu0 %v279
  %380 = vmatprep.subr.bf16.mxu0 0
  %381 = vmatpush1.bf16.msra.mxu0 %v278
  %382 = vmatprep.subr.bf16.mxu0 0
  %383 = vmatpush1.bf16.msra.mxu0 %v277
  %384 = vmatprep.subr.bf16.mxu0 0
  %385 = vmatpush1.bf16.msra.mxu0 %v276
  %386 = vmatprep.subr.bf16.mxu0 0
  %387 = vmatpush1.bf16.msra.mxu0 %v275
  %388 = vmatprep.subr.bf16.mxu0 0
  %389 = vmatpush1.bf16.msra.mxu0 %v274
  %390 = vmatprep.subr.bf16.mxu0 0
  %391 = vmatpush2.bf16.msra.mxu0 %v289
  %392 = vmatprep.subr.bf16.mxu0 0
  %393 = vmatpush2.bf16.msra.mxu0 %v288
  %394 = vmatprep.subr.bf16.mxu0 0
  %395 = vmatpush2.bf16.msra.mxu0 %v287
  %396 = vmatprep.subr.bf16.mxu0 0
  %397 = vmatpush2.bf16.msra.mxu0 %v286
  %398 = vmatprep.subr.bf16.mxu0 0
  %399 = vmatpush2.bf16.msra.mxu0 %v285
  %400 = vmatprep.subr.bf16.mxu0 0
  %401 = vmatpush2.bf16.msra.mxu0 %v284
  %402 = vmatprep.subr.bf16.mxu0 0
  %403 = vmatpush2.bf16.msra.mxu0 %v283
  %404 = vmatprep.subr.bf16.mxu0 0
  %405 = vmatpush2.bf16.msra.mxu0 %v282
  %406 = vmatprep.mubr.bf16.mxu0 %v108
  %407 = vmatmul.mubr.bf16.gmra.mxu0 %v107
  %v408 = vpop.f32.mrf.mxu0
  %v409 = vadd.f32 %v369, %v408
  %v410 = vpop.f32.mrf.mxu0
  %v411 = vpop.f32.mrf.mxu0
  %v412 = vpop.f32.mrf.mxu0
  %413 = vdwg.mxu0
  %414 = vmatprep.subr.bf16.mxu0 0
  %415 = vmatpush1.bf16.msra.mxu0 0
  %416 = vmatprep.subr.bf16.mxu0 0
  %417 = vmatpush1.bf16.msra.mxu0 0
  %418 = vmatprep.subr.bf16.mxu0 0
  %419 = vmatpush1.bf16.msra.mxu0 0
  %420 = vmatprep.subr.bf16.mxu0 0
  %421 = vmatpush1.bf16.msra.mxu0 0
  %422 = vmatprep.subr.bf16.mxu0 0
  %423 = vmatpush1.bf16.msra.mxu0 %v293
  %424 = vmatprep.subr.bf16.mxu0 0
  %425 = vmatpush1.bf16.msra.mxu0 %v292
  %426 = vmatprep.subr.bf16.mxu0 0
  %427 = vmatpush1.bf16.msra.mxu0 %v291
  %428 = vmatprep.subr.bf16.mxu0 0
  %429 = vmatpush1.bf16.msra.mxu0 %v290
  %430 = vmatprep.subr.bf16.mxu0 0
  %431 = vmatpush2.bf16.msra.mxu0 0
  %432 = vmatprep.subr.bf16.mxu0 0
  %433 = vmatpush2.bf16.msra.mxu0 0
  %434 = vmatprep.subr.bf16.mxu0 0
  %435 = vmatpush2.bf16.msra.mxu0 0
  %436 = vmatprep.subr.bf16.mxu0 0
  %437 = vmatpush2.bf16.msra.mxu0 0
  %438 = vmatprep.subr.bf16.mxu0 0
  %439 = vmatpush2.bf16.msra.mxu0 0
  %440 = vmatprep.subr.bf16.mxu0 0
  %441 = vmatpush2.bf16.msra.mxu0 0
  %442 = vmatprep.subr.bf16.mxu0 0
  %443 = vmatpush2.bf16.msra.mxu0 0
  %444 = vmatprep.subr.bf16.mxu0 0
  %445 = vmatpush2.bf16.msra.mxu0 0
  %446 = vmatprep.mubr.bf16.mxu0 0
  %447 = vmatmul.mubr.bf16.gmra.mxu0 %v332
  %v448 = vpop.f32.mrf.mxu0
  %v449 = vadd.f32 %v409, %v448
  %v450 = vpop.f32.mrf.mxu0
  %v451 = vpop.f32.mrf.mxu0
  %v452 = vpop.f32.mrf.mxu0
  %453 = vdwg.mxu0
  %v454 = vmax.f32 %v449, 0.0
  %v455 = vpack.c.bf16 %v454, %v454
  %456 = vst [vmem:[%s3] sm:$0xf] %v455
  // Predicated region
  $region14: #{atari_dqn_forward.6} parent=0 // pred_check
    _
  $region15: #{atari_dqn_forward.6} parent=0 // pred_check_branch
    %458 = sbr.rel (0) target = $region17
  $region16: #{atari_dqn_forward.6} parent=0 // pred_region
    _
  $region17: #{atari_dqn_forward.6} parent=0 // pred_fallthru
    _
  // Predicated region
  $region18: #{atari_dqn_forward.6} parent=0 // pred_check
    _
  $region19: #{atari_dqn_forward.6} parent=0 // pred_check_branch
    %460 = sbr.rel (0) target = $region21
  $region20: #{atari_dqn_forward.6} parent=0 // pred_region
    _
  $region21: #{atari_dqn_forward.6} parent=0 // pred_fallthru
    _

// kernel: atari_dqn_forward.7
$region0: #{atari_dqn_forward.7}
  #allocation0 [shape = 'u32[]', space=smem, size = 0x4, offset = 0x4, fixed_abs, tag = 'smem constant byte address 0x4 - core index']
  #allocation1 [shape = 'u32[144,128]{1,0:T(1,128)}', space=vmem, size = 0x12000, scoped, tag = 'internal scratch']
  %s0 = inlined_call_operand.vmem [shape: bf16[2,256], index: 0, kind: input, shape index: {}]
  %s1 = inlined_call_operand.vmem [shape: bf16[256,512], index: 1, kind: input, shape index: {}]
  %s2 = inlined_call_operand.vmem [shape: f32[1,512], index: 2, kind: input, shape index: {}]
  %s3 = inlined_call_operand.vmem [shape: bf16[512,128], index: 3, kind: input, shape index: {}]
  %s4 = inlined_call_operand.vmem [shape: f32[1,128], index: 4, kind: input, shape index: {}]
  %s5 = inlined_call_operand.hbm [shape: f32[2,128], index: 5, kind: output, shape index: {}]
  %s6 = sld [smem:[#allocation0]]
  $region30: #{atari_dqn_forward.7} parent=0
    _
  %s8 = ssub.s32 1, %s6
  %s9 = scalar_select 0, %s8, %s6
  $region1: #{atari_dqn_forward.7} parent=0
    #allocation2 [shape = 'u8[1024]{0}', space=vmem, size = 0x400, scoped, tag = 'output window, operand 0, single buffered']
    #allocation3 [shape = 's32[1]{0}', space=sflag, size = 0x4, scoped, tag = 'scoped memory for atari_dqn_forward.7']
    %10 = vsyncpa [#allocation3], 0
    // Predicated region
    $region2: #{atari_dqn_forward.7} parent=1 // pred_check
      _
    $region3: #{atari_dqn_forward.7} parent=1 // pred_check_branch
      %12 = sbr.rel (0) target = $region5
    $region4: #{atari_dqn_forward.7} parent=1 // pred_region
      _
    $region5: #{atari_dqn_forward.7} parent=1 // pred_fallthru
      _
    // Predicated region
    $region6: #{atari_dqn_forward.7} parent=1 // pred_check
      _
    $region7: #{atari_dqn_forward.7} parent=1 // pred_check_branch
      %14 = sbr.rel (0) target = $region9
    $region8: #{atari_dqn_forward.7} parent=1 // pred_region
      _
    $region9: #{atari_dqn_forward.7} parent=1 // pred_fallthru
      _
    // Predicated region
    $region10: #{atari_dqn_forward.7} parent=1 // pred_check
      _
    $region11: #{atari_dqn_forward.7} parent=1 // pred_check_branch
      %16 = sbr.rel (0) target = $region13
    $region12: #{atari_dqn_forward.7} parent=1 // pred_region
      _
    $region13: #{atari_dqn_forward.7} parent=1 // pred_fallthru
      _
    // Predicated region
    $region14: #{atari_dqn_forward.7} parent=1 // pred_check
      _
    $region15: #{atari_dqn_forward.7} parent=1 // pred_check_branch
      %18 = sbr.rel (0) target = $region17
    $region16: #{atari_dqn_forward.7} parent=1 // pred_region
      _
    $region17: #{atari_dqn_forward.7} parent=1 // pred_fallthru
      _
    // Predicated region
    $region18: #{atari_dqn_forward.7} parent=1 // pred_check
      _
    $region19: #{atari_dqn_forward.7} parent=1 // pred_check_branch
      %20 = sbr.rel (0) target = $region21
    $region20: #{atari_dqn_forward.7} parent=1 // pred_region
      _
    $region21: #{atari_dqn_forward.7} parent=1 // pred_fallthru
      _
    %v22 = vld [vmem:[%s0] sm:$0x3]
    %v23 = vld [vmem:[%s1] sm:$0xff]
    %v24 = vld [vmem:[%s1 + $0x8] sm:$0xff]
    %v25 = vld [vmem:[%s1 + $0x10] sm:$0xff]
    %v26 = vld [vmem:[%s1 + $0x18] sm:$0xff]
    %v27 = vld [vmem:[%s1 + $0x20] sm:$0xff]
    %v28 = vld [vmem:[%s1 + $0x28] sm:$0xff]
    %v29 = vld [vmem:[%s1 + $0x30] sm:$0xff]
    %v30 = vld [vmem:[%s1 + $0x38] sm:$0xff]
    %v31 = vld [vmem:[%s1 + $0x40] sm:$0xff]
    %v32 = vld [vmem:[%s1 + $0x48] sm:$0xff]
    %v33 = vld [vmem:[%s1 + $0x50] sm:$0xff]
    %v34 = vld [vmem:[%s1 + $0x58] sm:$0xff]
    %v35 = vld [vmem:[%s1 + $0x60] sm:$0xff]
    %v36 = vld [vmem:[%s1 + $0x68] sm:$0xff]
    %v37 = vld [vmem:[%s1 + $0x70] sm:$0xff]
    %v38 = vld [vmem:[%s1 + $0x78] sm:$0xff]
    %v39 = vld [vmem:[%s1 + $0x80] sm:$0xff]
    %v40 = vld [vmem:[%s1 + $0x88] sm:$0xff]
    %v41 = vld [vmem:[%s1 + $0x90] sm:$0xff]
    %v42 = vld [vmem:[%s1 + $0x98] sm:$0xff]
    %v43 = vld [vmem:[%s1 + $0xa0] sm:$0xff]
    %v44 = vld [vmem:[%s1 + $0xa8] sm:$0xff]
    %v45 = vld [vmem:[%s1 + $0xb0] sm:$0xff]
    %v46 = vld [vmem:[%s1 + $0xb8] sm:$0xff]
    %v47 = vld [vmem:[%s1 + $0xc0] sm:$0xff]
    %v48 = vld [vmem:[%s1 + $0xc8] sm:$0xff]
    %v49 = vld [vmem:[%s1 + $0xd0] sm:$0xff]
    %v50 = vld [vmem:[%s1 + $0xd8] sm:$0xff]
    %v51 = vld [vmem:[%s1 + $0xe0] sm:$0xff]
    %v52 = vld [vmem:[%s1 + $0xe8] sm:$0xff]
    %v53 = vld [vmem:[%s1 + $0xf0] sm:$0xff]
    %v54 = vld [vmem:[%s1 + $0xf8] sm:$0xff]
    %v55 = vld [vmem:[%s1 + $0x100] sm:$0xff]
    %v56 = vld [vmem:[%s1 + $0x108] sm:$0xff]
    %v57 = vld [vmem:[%s1 + $0x110] sm:$0xff]
    %v58 = vld [vmem:[%s1 + $0x118] sm:$0xff]
    %v59 = vld [vmem:[%s1 + $0x120] sm:$0xff]
    %v60 = vld [vmem:[%s1 + $0x128] sm:$0xff]
    %v61 = vld [vmem:[%s1 + $0x130] sm:$0xff]
    %v62 = vld [vmem:[%s1 + $0x138] sm:$0xff]
    %v63 = vld [vmem:[%s1 + $0x140] sm:$0xff]
    %v64 = vld [vmem:[%s1 + $0x148] sm:$0xff]
    %v65 = vld [vmem:[%s1 + $0x150] sm:$0xff]
    %v66 = vld [vmem:[%s1 + $0x158] sm:$0xff]
    %v67 = vld [vmem:[%s1 + $0x160] sm:$0xff]
    %v68 = vld [vmem:[%s1 + $0x168] sm:$0xff]
    %v69 = vld [vmem:[%s1 + $0x170] sm:$0xff]
    %v70 = vld [vmem:[%s1 + $0x178] sm:$0xff]
    %v71 = vld [vmem:[%s1 + $0x180] sm:$0xff]
    %v72 = vld [vmem:[%s1 + $0x188] sm:$0xff]
    %v73 = vld [vmem:[%s1 + $0x190] sm:$0xff]
    %v74 = vld [vmem:[%s1 + $0x198] sm:$0xff]
    %v75 = vld [vmem:[%s1 + $0x1a0] sm:$0xff]
    %v76 = vld [vmem:[%s1 + $0x1a8] sm:$0xff]
    %v77 = vld [vmem:[%s1 + $0x1b0] sm:$0xff]
    %v78 = vld [vmem:[%s1 + $0x1b8] sm:$0xff]
    %v79 = vld [vmem:[%s1 + $0x1c0] sm:$0xff]
    %v80 = vld [vmem:[%s1 + $0x1c8] sm:$0xff]
    %v81 = vld [vmem:[%s1 + $0x1d0] sm:$0xff]
    %v82 = vld [vmem:[%s1 + $0x1d8] sm:$0xff]
    %v83 = vld [vmem:[%s1 + $0x1e0] sm:$0xff]
    %v84 = vld [vmem:[%s1 + $0x1e8] sm:$0xff]
    %v85 = vld [vmem:[%s1 + $0x1f0] sm:$0xff]
    %v86 = vld [vmem:[%s1 + $0x1f8] sm:$0xff]
    %v87 = vld [vmem:[%s2] sm:$0xf]
    %v89 = vlaneseq
    %v90 = vshrl.u32 %v89, 7
    %v91 = vsub.s32 0, %v90
    %v92 = vrot.slane %v87, %v91
    %v93 = vlaneseq
    %v94 = vshrl.u32 %v93, 7
    %v95 = vsub.s32 1, %v94
    %v96 = vrot.slane %v87, %v95
    %v97 = vlaneseq
    %v98 = vshrl.u32 %v97, 7
    %v99 = vsub.s32 2, %v98
    %v100 = vrot.slane %v87, %v99
    %v101 = vlaneseq
    %v102 = vshrl.u32 %v101, 7
    %v103 = vsub.s32 3, %v102
    %v104 = vrot.slane %v87, %v103
    %v111 = vunpack.c.l.s4 1966171168
    %v112 = vunpack.c.0.s8 %v111
    %v113 = vlaneseq
    %v114 = vshrl.u32 %v113, 7
    %v115 = vsub.s32 %v112, %v114
    %v116 = vrot.slane %v22, %v115
    %v117 = vcombine.high %v116, %v116
    %v119 = vunpack.c.l.s4 1966171168
    %v120 = vunpack.c.0.s8 %v119
    %v121 = vlaneseq
    %v122 = vshrl.u32 %v121, 7
    %v123 = vsub.s32 %v120, %v122
    %v124 = vrot.slane %v116, %v123
    %v126 = vunpack.c.l.s4 1966171168
    %v127 = vunpack.c.0.s8 %v126
    %v128 = vlaneseq
    %v129 = vshrl.u32 %v128, 7
    %v130 = vsub.s32 %v127, %v129
    %v131 = vrot.slane %v117, %v130
    %v198 = vunpack.c.l.b16 %v23
    %v199 = vunpack.c.h.b16 %v23
    %v200 = vunpack.c.l.b16 %v24
    %v201 = vunpack.c.h.b16 %v24
    %v202 = vunpack.c.l.b16 %v25
    %v203 = vunpack.c.h.b16 %v25
    %v204 = vunpack.c.l.b16 %v26
    %v205 = vunpack.c.h.b16 %v26
    %v206 = vunpack.c.l.b16 %v27
    %v207 = vunpack.c.h.b16 %v27
    %v208 = vunpack.c.l.b16 %v28
    %v209 = vunpack.c.h.b16 %v28
    %v210 = vunpack.c.l.b16 %v29
    %v211 = vunpack.c.h.b16 %v29
    %v212 = vunpack.c.l.b16 %v30
    %v213 = vunpack.c.h.b16 %v30
    %v214 = vunpack.c.l.b16 %v31
    %v215 = vunpack.c.h.b16 %v31
    %v216 = vunpack.c.l.b16 %v32
    %v217 = vunpack.c.h.b16 %v32
    %v218 = vunpack.c.l.b16 %v33
    %v219 = vunpack.c.h.b16 %v33
    %v220 = vunpack.c.l.b16 %v34
    %v221 = vunpack.c.h.b16 %v34
    %v222 = vunpack.c.l.b16 %v35
    %v223 = vunpack.c.h.b16 %v35
    %v224 = vunpack.c.l.b16 %v36
    %v225 = vunpack.c.h.b16 %v36
    %v226 = vunpack.c.l.b16 %v37
    %v227 = vunpack.c.h.b16 %v37
    %v228 = vunpack.c.l.b16 %v38
    %v229 = vunpack.c.h.b16 %v38
    %v230 = vunpack.c.l.b16 %v39
    %v231 = vunpack.c.h.b16 %v39
    %v232 = vunpack.c.l.b16 %v40
    %v233 = vunpack.c.h.b16 %v40
    %v234 = vunpack.c.l.b16 %v41
    %v235 = vunpack.c.h.b16 %v41
    %v236 = vunpack.c.l.b16 %v42
    %v237 = vunpack.c.h.b16 %v42
    %v238 = vunpack.c.l.b16 %v43
    %v239 = vunpack.c.h.b16 %v43
    %v240 = vunpack.c.l.b16 %v44
    %v241 = vunpack.c.h.b16 %v44
    %v242 = vunpack.c.l.b16 %v45
    %v243 = vunpack.c.h.b16 %v45
    %v244 = vunpack.c.l.b16 %v46
    %v245 = vunpack.c.h.b16 %v46
    %v246 = vunpack.c.l.b16 %v47
    %v247 = vunpack.c.h.b16 %v47
    %v248 = vunpack.c.l.b16 %v48
    %v249 = vunpack.c.h.b16 %v48
    %v250 = vunpack.c.l.b16 %v49
    %v251 = vunpack.c.h.b16 %v49
    %v252 = vunpack.c.l.b16 %v50
    %v253 = vunpack.c.h.b16 %v50
    %v254 = vunpack.c.l.b16 %v51
    %v255 = vunpack.c.h.b16 %v51
    %v256 = vunpack.c.l.b16 %v52
    %v257 = vunpack.c.h.b16 %v52
    %v258 = vunpack.c.l.b16 %v53
    %v259 = vunpack.c.h.b16 %v53
    %v260 = vunpack.c.l.b16 %v54
    %v261 = vunpack.c.h.b16 %v54
    %v262 = vunpack.c.l.b16 %v55
    %v263 = vunpack.c.h.b16 %v55
    %v264 = vunpack.c.l.b16 %v56
    %v265 = vunpack.c.h.b16 %v56
    %v266 = vunpack.c.l.b16 %v57
    %v267 = vunpack.c.h.b16 %v57
    %v268 = vunpack.c.l.b16 %v58
    %v269 = vunpack.c.h.b16 %v58
    %v270 = vunpack.c.l.b16 %v59
    %v271 = vunpack.c.h.b16 %v59
    %v272 = vunpack.c.l.b16 %v60
    %v273 = vunpack.c.h.b16 %v60
    %v274 = vunpack.c.l.b16 %v61
    %v275 = vunpack.c.h.b16 %v61
    %v276 = vunpack.c.l.b16 %v62
    %v277 = vunpack.c.h.b16 %v62
    %v278 = vunpack.c.l.b16 %v63
    %v279 = vunpack.c.h.b16 %v63
    %v280 = vunpack.c.l.b16 %v64
    %v281 = vunpack.c.h.b16 %v64
    %v282 = vunpack.c.l.b16 %v65
    %v283 = vunpack.c.h.b16 %v65
    %v284 = vunpack.c.l.b16 %v66
    %v285 = vunpack.c.h.b16 %v66
    %v286 = vunpack.c.l.b16 %v67
    %v287 = vunpack.c.h.b16 %v67
    %v288 = vunpack.c.l.b16 %v68
    %v289 = vunpack.c.h.b16 %v68
    %v290 = vunpack.c.l.b16 %v69
    %v291 = vunpack.c.h.b16 %v69
    %v292 = vunpack.c.l.b16 %v70
    %v293 = vunpack.c.h.b16 %v70
    %v294 = vunpack.c.l.b16 %v71
    %v295 = vunpack.c.h.b16 %v71
    %v296 = vunpack.c.l.b16 %v72
    %v297 = vunpack.c.h.b16 %v72
    %v298 = vunpack.c.l.b16 %v73
    %v299 = vunpack.c.h.b16 %v73
    %v300 = vunpack.c.l.b16 %v74
    %v301 = vunpack.c.h.b16 %v74
    %v302 = vunpack.c.l.b16 %v75
    %v303 = vunpack.c.h.b16 %v75
    %v304 = vunpack.c.l.b16 %v76
    %v305 = vunpack.c.h.b16 %v76
    %v306 = vunpack.c.l.b16 %v77
    %v307 = vunpack.c.h.b16 %v77
    %v308 = vunpack.c.l.b16 %v78
    %v309 = vunpack.c.h.b16 %v78
    %v310 = vunpack.c.l.b16 %v79
    %v311 = vunpack.c.h.b16 %v79
    %v312 = vunpack.c.l.b16 %v80
    %v313 = vunpack.c.h.b16 %v80
    %v314 = vunpack.c.l.b16 %v81
    %v315 = vunpack.c.h.b16 %v81
    %v316 = vunpack.c.l.b16 %v82
    %v317 = vunpack.c.h.b16 %v82
    %v318 = vunpack.c.l.b16 %v83
    %v319 = vunpack.c.h.b16 %v83
    %v320 = vunpack.c.l.b16 %v84
    %v321 = vunpack.c.h.b16 %v84
    %v322 = vunpack.c.l.b16 %v85
    %v323 = vunpack.c.h.b16 %v85
    %v324 = vunpack.c.l.b16 %v86
    %v325 = vunpack.c.h.b16 %v86
    %v326 = vpack.c.b16 %v202, %v198
    %v327 = vpack.c.b16 %v203, %v199
    %v328 = vpack.c.b16 %v204, %v200
    %v329 = vpack.c.b16 %v205, %v201
    %v330 = vpack.c.b16 %v210, %v206
    %v331 = vpack.c.b16 %v211, %v207
    %v332 = vpack.c.b16 %v212, %v208
    %v333 = vpack.c.b16 %v213, %v209
    %v334 = vpack.c.b16 %v218, %v214
    %v335 = vpack.c.b16 %v219, %v215
    %v336 = vpack.c.b16 %v220, %v216
    %v337 = vpack.c.b16 %v221, %v217
    %v338 = vpack.c.b16 %v226, %v222
    %v339 = vpack.c.b16 %v227, %v223
    %v340 = vpack.c.b16 %v228, %v224
    %v341 = vpack.c.b16 %v229, %v225
    %v342 = vpack.c.b16 %v234, %v230
    %v343 = vpack.c.b16 %v235, %v231
    %v344 = vpack.c.b16 %v236, %v232
    %v345 = vpack.c.b16 %v237, %v233
    %v346 = vpack.c.b16 %v242, %v238
    %v347 = vpack.c.b16 %v243, %v239
    %v348 = vpack.c.b16 %v244, %v240
    %v349 = vpack.c.b16 %v245, %v241
    %v350 = vpack.c.b16 %v250, %v246
    %v351 = vpack.c.b16 %v251, %v247
    %v352 = vpack.c.b16 %v252, %v248
    %v353 = vpack.c.b16 %v253, %v249
    %v354 = vpack.c.b16 %v258, %v254
    %v355 = vpack.c.b16 %v259, %v255
    %v356 = vpack.c.b16 %v260, %v256
    %v357 = vpack.c.b16 %v261, %v257
    %v358 = vpack.c.b16 %v266, %v262
    %v359 = vpack.c.b16 %v267, %v263
    %v360 = vpack.c.b16 %v268, %v264
    %v361 = vpack.c.b16 %v269, %v265
    %v362 = vpack.c.b16 %v274, %v270
    %v363 = vpack.c.b16 %v275, %v271
    %v364 = vpack.c.b16 %v276, %v272
    %v365 = vpack.c.b16 %v277, %v273
    %v366 = vpack.c.b16 %v282, %v278
    %v367 = vpack.c.b16 %v283, %v279
    %v368 = vpack.c.b16 %v284, %v280
    %v369 = vpack.c.b16 %v285, %v281
    %v370 = vpack.c.b16 %v290, %v286
    %v371 = vpack.c.b16 %v291, %v287
    %v372 = vpack.c.b16 %v292, %v288
    %v373 = vpack.c.b16 %v293, %v289
    %v374 = vpack.c.b16 %v298, %v294
    %v375 = vpack.c.b16 %v299, %v295
    %v376 = vpack.c.b16 %v300, %v296
    %v377 = vpack.c.b16 %v301, %v297
    %v378 = vpack.c.b16 %v306, %v302
    %v379 = vpack.c.b16 %v307, %v303
    %v380 = vpack.c.b16 %v308, %v304
    %v381 = vpack.c.b16 %v309, %v305
    %v382 = vpack.c.b16 %v314, %v310
    %v383 = vpack.c.b16 %v315, %v311
    %v384 = vpack.c.b16 %v316, %v312
    %v385 = vpack.c.b16 %v317, %v313
    %v386 = vpack.c.b16 %v322, %v318
    %v387 = vpack.c.b16 %v323, %v319
    %v388 = vpack.c.b16 %v324, %v320
    %v389 = vpack.c.b16 %v325, %v321
    %454 = vmatprep.subr.bf16.mxu0 %v355
    %455 = vmatpush1.bf16.msra.mxu0 %v354
    %456 = vmatprep.subr.bf16.mxu0 %v351
    %457 = vmatpush1.bf16.msra.mxu0 %v350
    %458 = vmatprep.subr.bf16.mxu0 %v347
    %459 = vmatpush1.bf16.msra.mxu0 %v346
    %460 = vmatprep.subr.bf16.mxu0 %v343
    %461 = vmatpush1.bf16.msra.mxu0 %v342
    %462 = vmatprep.subr.bf16.mxu0 %v339
    %463 = vmatpush1.bf16.msra.mxu0 %v338
    %464 = vmatprep.subr.bf16.mxu0 %v335
    %465 = vmatpush1.bf16.msra.mxu0 %v334
    %466 = vmatprep.subr.bf16.mxu0 %v331
    %467 = vmatpush1.bf16.msra.mxu0 %v330
    %468 = vmatprep.subr.bf16.mxu0 %v327
    %469 = vmatpush1.bf16.msra.mxu0 %v326
    %470 = vmatprep.subr.bf16.mxu0 %v387
    %471 = vmatpush2.bf16.msra.mxu0 %v386
    %472 = vmatprep.subr.bf16.mxu0 %v383
    %473 = vmatpush2.bf16.msra.mxu0 %v382
    %474 = vmatprep.subr.bf16.mxu0 %v379
    %475 = vmatpush2.bf16.msra.mxu0 %v378
    %476 = vmatprep.subr.bf16.mxu0 %v375
    %477 = vmatpush2.bf16.msra.mxu0 %v374
    %478 = vmatprep.subr.bf16.mxu0 %v371
    %479 = vmatpush2.bf16.msra.mxu0 %v370
    %480 = vmatprep.subr.bf16.mxu0 %v367
    %481 = vmatpush2.bf16.msra.mxu0 %v366
    %482 = vmatprep.subr.bf16.mxu0 %v363
    %483 = vmatpush2.bf16.msra.mxu0 %v362
    %484 = vmatprep.subr.bf16.mxu0 %v359
    %485 = vmatpush2.bf16.msra.mxu0 %v358
    %486 = vmatprep.mubr.bf16.mxu0 %v131
    %487 = vmatmul.mubr.bf16.gmra.mxu0 %v124
    %v488 = vpop.f32.mrf.mxu0
    %v489 = vadd.f32 %v92, %v488
    %v490 = vpop.f32.mrf.mxu0
    %v491 = vadd.f32 %v96, %v490
    %v492 = vpop.f32.mrf.mxu0
    %v493 = vpop.f32.mrf.mxu0
    %494 = vdwg.mxu0
    %495 = vmatprep.subr.bf16.mxu0 %v357
    %496 = vmatpush1.bf16.msra.mxu0 %v356
    %497 = vmatprep.subr.bf16.mxu0 %v353
    %498 = vmatpush1.bf16.msra.mxu0 %v352
    %499 = vmatprep.subr.bf16.mxu0 %v349
    %500 = vmatpush1.bf16.msra.mxu0 %v348
    %501 = vmatprep.subr.bf16.mxu0 %v345
    %502 = vmatpush1.bf16.msra.mxu0 %v344
    %503 = vmatprep.subr.bf16.mxu0 %v341
    %504 = vmatpush1.bf16.msra.mxu0 %v340
    %505 = vmatprep.subr.bf16.mxu0 %v337
    %506 = vmatpush1.bf16.msra.mxu0 %v336
    %507 = vmatprep.subr.bf16.mxu0 %v333
    %508 = vmatpush1.bf16.msra.mxu0 %v332
    %509 = vmatprep.subr.bf16.mxu0 %v329
    %510 = vmatpush1.bf16.msra.mxu0 %v328
    %511 = vmatprep.subr.bf16.mxu0 %v389
    %512 = vmatpush2.bf16.msra.mxu0 %v388
    %513 = vmatprep.subr.bf16.mxu0 %v385
    %514 = vmatpush2.bf16.msra.mxu0 %v384
    %515 = vmatprep.subr.bf16.mxu0 %v381
    %516 = vmatpush2.bf16.msra.mxu0 %v380
    %517 = vmatprep.subr.bf16.mxu0 %v377
    %518 = vmatpush2.bf16.msra.mxu0 %v376
    %519 = vmatprep.subr.bf16.mxu0 %v373
    %520 = vmatpush2.bf16.msra.mxu0 %v372
    %521 = vmatprep.subr.bf16.mxu0 %v369
    %522 = vmatpush2.bf16.msra.mxu0 %v368
    %523 = vmatprep.subr.bf16.mxu0 %v365
    %524 = vmatpush2.bf16.msra.mxu0 %v364
    %525 = vmatprep.subr.bf16.mxu0 %v361
    %526 = vmatpush2.bf16.msra.mxu0 %v360
    %527 = vmatprep.mubr.bf16.mxu0 %v131
    %528 = vmatmul.mubr.bf16.gmra.mxu0 %v124
    %v529 = vpop.f32.mrf.mxu0
    %v530 = vadd.f32 %v100, %v529
    %v531 = vpop.f32.mrf.mxu0
    %v532 = vadd.f32 %v104, %v531
    %v533 = vpop.f32.mrf.mxu0
    %v534 = vpop.f32.mrf.mxu0
    %535 = vdwg.mxu0
    %v536 = vmax.f32 %v489, 0.0
    %v537 = vmax.f32 %v491, 0.0
    %v538 = vmax.f32 %v530, 0.0
    %v539 = vmax.f32 %v532, 0.0
    %v540 = vpack.c.bf16 %v536, %v536
    %v541 = vpack.c.bf16 %v537, %v537
    %v542 = vpack.c.bf16 %v538, %v538
    %v543 = vpack.c.bf16 %v539, %v539
    %v544 = vld [vmem:[%s3] sm:$0xf]
    %v545 = vld [vmem:[%s3 + $0x4] sm:$0xf]
    %v546 = vld [vmem:[%s3 + $0x8] sm:$0xf]
    %v547 = vld [vmem:[%s3 + $0xc] sm:$0xf]
    %v548 = vld [vmem:[%s3 + $0x10] sm:$0xf]
    %v549 = vld [vmem:[%s3 + $0x14] sm:$0xf]
    %v550 = vld [vmem:[%s3 + $0x18] sm:$0xf]
    %v551 = vld [vmem:[%s3 + $0x1c] sm:$0xf]
    %v552 = vld [vmem:[%s3 + $0x20] sm:$0xf]
    %v553 = vld [vmem:[%s3 + $0x24] sm:$0xf]
    %v554 = vld [vmem:[%s3 + $0x28] sm:$0xf]
    %v555 = vld [vmem:[%s3 + $0x2c] sm:$0xf]
    %v556 = vld [vmem:[%s3 + $0x30] sm:$0xf]
    %v557 = vld [vmem:[%s3 + $0x34] sm:$0xf]
    %v558 = vld [vmem:[%s3 + $0x38] sm:$0xf]
    %v559 = vld [vmem:[%s3 + $0x3c] sm:$0xf]
    %v560 = vld [vmem:[%s3 + $0x40] sm:$0xf]
    %v561 = vld [vmem:[%s3 + $0x44] sm:$0xf]
    %v562 = vld [vmem:[%s3 + $0x48] sm:$0xf]
    %v563 = vld [vmem:[%s3 + $0x4c] sm:$0xf]
    %v564 = vld [vmem:[%s3 + $0x50] sm:$0xf]
    %v565 = vld [vmem:[%s3 + $0x54] sm:$0xf]
    %v566 = vld [vmem:[%s3 + $0x58] sm:$0xf]
    %v567 = vld [vmem:[%s3 + $0x5c] sm:$0xf]
    %v568 = vld [vmem:[%s3 + $0x60] sm:$0xf]
    %v569 = vld [vmem:[%s3 + $0x64] sm:$0xf]
    %v570 = vld [vmem:[%s3 + $0x68] sm:$0xf]
    %v571 = vld [vmem:[%s3 + $0x6c] sm:$0xf]
    %v572 = vld [vmem:[%s3 + $0x70] sm:$0xf]
    %v573 = vld [vmem:[%s3 + $0x74] sm:$0xf]
    %v574 = vld [vmem:[%s3 + $0x78] sm:$0xf]
    %v575 = vld [vmem:[%s3 + $0x7c] sm:$0xf]
    %v576 = vld [vmem:[%s3 + $0x80] sm:$0xf]
    %v577 = vld [vmem:[%s3 + $0x84] sm:$0xf]
    %v578 = vld [vmem:[%s3 + $0x88] sm:$0xf]
    %v579 = vld [vmem:[%s3 + $0x8c] sm:$0xf]
    %v580 = vld [vmem:[%s3 + $0x90] sm:$0xf]
    %v581 = vld [vmem:[%s3 + $0x94] sm:$0xf]
    %v582 = vld [vmem:[%s3 + $0x98] sm:$0xf]
    %v583 = vld [vmem:[%s3 + $0x9c] sm:$0xf]
    %v584 = vld [vmem:[%s3 + $0xa0] sm:$0xf]
    %v585 = vld [vmem:[%s3 + $0xa4] sm:$0xf]
    %v586 = vld [vmem:[%s3 + $0xa8] sm:$0xf]
    %v587 = vld [vmem:[%s3 + $0xac] sm:$0xf]
    %v588 = vld [vmem:[%s3 + $0xb0] sm:$0xf]
    %v589 = vld [vmem:[%s3 + $0xb4] sm:$0xf]
    %v590 = vld [vmem:[%s3 + $0xb8] sm:$0xf]
    %v591 = vld [vmem:[%s3 + $0xbc] sm:$0xf]
    %v592 = vld [vmem:[%s3 + $0xc0] sm:$0xf]
    %v593 = vld [vmem:[%s3 + $0xc4] sm:$0xf]
    %v594 = vld [vmem:[%s3 + $0xc8] sm:$0xf]
    %v595 = vld [vmem:[%s3 + $0xcc] sm:$0xf]
    %v596 = vld [vmem:[%s3 + $0xd0] sm:$0xf]
    %v597 = vld [vmem:[%s3 + $0xd4] sm:$0xf]
    %v598 = vld [vmem:[%s3 + $0xd8] sm:$0xf]
    %v599 = vld [vmem:[%s3 + $0xdc] sm:$0xf]
    %v600 = vld [vmem:[%s3 + $0xe0] sm:$0xf]
    %v601 = vld [vmem:[%s3 + $0xe4] sm:$0xf]
    %v602 = vld [vmem:[%s3 + $0xe8] sm:$0xf]
    %v603 = vld [vmem:[%s3 + $0xec] sm:$0xf]
    %v604 = vld [vmem:[%s3 + $0xf0] sm:$0xf]
    %v605 = vld [vmem:[%s3 + $0xf4] sm:$0xf]
    %v606 = vld [vmem:[%s3 + $0xf8] sm:$0xf]
    %v607 = vld [vmem:[%s3 + $0xfc] sm:$0xf]
    %v608 = vld [vmem:[%s4] sm:$0x1]
    %v610 = vlaneseq
    %v611 = vshrl.u32 %v610, 7
    %v612 = vsub.s32 0, %v611
    %v613 = vrot.slane %v608, %v612
    %v679 = vunpack.c.l.b16 %v544
    %v680 = vunpack.c.l.b16 %v545
    %v681 = vunpack.c.l.b16 %v546
    %v682 = vunpack.c.l.b16 %v547
    %v683 = vunpack.c.l.b16 %v548
    %v684 = vunpack.c.l.b16 %v549
    %v685 = vunpack.c.l.b16 %v550
    %v686 = vunpack.c.l.b16 %v551
    %v687 = vunpack.c.l.b16 %v552
    %v688 = vunpack.c.l.b16 %v553
    %v689 = vunpack.c.l.b16 %v554
    %v690 = vunpack.c.l.b16 %v555
    %v691 = vunpack.c.l.b16 %v556
    %v692 = vunpack.c.l.b16 %v557
    %v693 = vunpack.c.l.b16 %v558
    %v694 = vunpack.c.l.b16 %v559
    %v695 = vunpack.c.l.b16 %v560
    %v696 = vunpack.c.l.b16 %v561
    %v697 = vunpack.c.l.b16 %v562
    %v698 = vunpack.c.l.b16 %v563
    %v699 = vunpack.c.l.b16 %v564
    %v700 = vunpack.c.l.b16 %v565
    %v701 = vunpack.c.l.b16 %v566
    %v702 = vunpack.c.l.b16 %v567
    %v703 = vunpack.c.l.b16 %v568
    %v704 = vunpack.c.l.b16 %v569
    %v705 = vunpack.c.l.b16 %v570
    %v706 = vunpack.c.l.b16 %v571
    %v707 = vunpack.c.l.b16 %v572
    %v708 = vunpack.c.l.b16 %v573
    %v709 = vunpack.c.l.b16 %v574
    %v710 = vunpack.c.l.b16 %v575
    %v711 = vunpack.c.l.b16 %v576
    %v712 = vunpack.c.l.b16 %v577
    %v713 = vunpack.c.l.b16 %v578
    %v714 = vunpack.c.l.b16 %v579
    %v715 = vunpack.c.l.b16 %v580
    %v716 = vunpack.c.l.b16 %v581
    %v717 = vunpack.c.l.b16 %v582
    %v718 = vunpack.c.l.b16 %v583
    %v719 = vunpack.c.l.b16 %v584
    %v720 = vunpack.c.l.b16 %v585
    %v721 = vunpack.c.l.b16 %v586
    %v722 = vunpack.c.l.b16 %v587
    %v723 = vunpack.c.l.b16 %v588
    %v724 = vunpack.c.l.b16 %v589
    %v725 = vunpack.c.l.b16 %v590
    %v726 = vunpack.c.l.b16 %v591
    %v727 = vunpack.c.l.b16 %v592
    %v728 = vunpack.c.l.b16 %v593
    %v729 = vunpack.c.l.b16 %v594
    %v730 = vunpack.c.l.b16 %v595
    %v731 = vunpack.c.l.b16 %v596
    %v732 = vunpack.c.l.b16 %v597
    %v733 = vunpack.c.l.b16 %v598
    %v734 = vunpack.c.l.b16 %v599
    %v735 = vunpack.c.l.b16 %v600
    %v736 = vunpack.c.l.b16 %v601
    %v737 = vunpack.c.l.b16 %v602
    %v738 = vunpack.c.l.b16 %v603
    %v739 = vunpack.c.l.b16 %v604
    %v740 = vunpack.c.l.b16 %v605
    %v741 = vunpack.c.l.b16 %v606
    %v742 = vunpack.c.l.b16 %v607
    %v743 = vpack.c.b16 %v680, %v679
    %v744 = vpack.c.b16 %v682, %v681
    %v745 = vpack.c.b16 %v684, %v683
    %v746 = vpack.c.b16 %v686, %v685
    %v747 = vpack.c.b16 %v688, %v687
    %v748 = vpack.c.b16 %v690, %v689
    %v749 = vpack.c.b16 %v692, %v691
    %v750 = vpack.c.b16 %v694, %v693
    %v751 = vpack.c.b16 %v696, %v695
    %v752 = vpack.c.b16 %v698, %v697
    %v753 = vpack.c.b16 %v700, %v699
    %v754 = vpack.c.b16 %v702, %v701
    %v755 = vpack.c.b16 %v704, %v703
    %v756 = vpack.c.b16 %v706, %v705
    %v757 = vpack.c.b16 %v708, %v707
    %v758 = vpack.c.b16 %v710, %v709
    %v759 = vpack.c.b16 %v712, %v711
    %v760 = vpack.c.b16 %v714, %v713
    %v761 = vpack.c.b16 %v716, %v715
    %v762 = vpack.c.b16 %v718, %v717
    %v763 = vpack.c.b16 %v720, %v719
    %v764 = vpack.c.b16 %v722, %v721
    %v765 = vpack.c.b16 %v724, %v723
    %v766 = vpack.c.b16 %v726, %v725
    %v767 = vpack.c.b16 %v728, %v727
    %v768 = vpack.c.b16 %v730, %v729
    %v769 = vpack.c.b16 %v732, %v731
    %v770 = vpack.c.b16 %v734, %v733
    %v771 = vpack.c.b16 %v736, %v735
    %v772 = vpack.c.b16 %v738, %v737
    %v773 = vpack.c.b16 %v740, %v739
    %v774 = vpack.c.b16 %v742, %v741
    %807 = vmatprep.subr.bf16.mxu0 0
    %808 = vmatpush1.bf16.msra.mxu0 %v750
    %809 = vmatprep.subr.bf16.mxu0 0
    %810 = vmatpush1.bf16.msra.mxu0 %v749
    %811 = vmatprep.subr.bf16.mxu0 0
    %812 = vmatpush1.bf16.msra.mxu0 %v748
    %813 = vmatprep.subr.bf16.mxu0 0
    %814 = vmatpush1.bf16.msra.mxu0 %v747
    %815 = vmatprep.subr.bf16.mxu0 0
    %816 = vmatpush1.bf16.msra.mxu0 %v746
    %817 = vmatprep.subr.bf16.mxu0 0
    %818 = vmatpush1.bf16.msra.mxu0 %v745
    %819 = vmatprep.subr.bf16.mxu0 0
    %820 = vmatpush1.bf16.msra.mxu0 %v744
    %821 = vmatprep.subr.bf16.mxu0 0
    %822 = vmatpush1.bf16.msra.mxu0 %v743
    %823 = vmatprep.subr.bf16.mxu0 0
    %824 = vmatpush2.bf16.msra.mxu0 %v758
    %825 = vmatprep.subr.bf16.mxu0 0
    %826 = vmatpush2.bf16.msra.mxu0 %v757
    %827 = vmatprep.subr.bf16.mxu0 0
    %828 = vmatpush2.bf16.msra.mxu0 %v756
    %829 = vmatprep.subr.bf16.mxu0 0
    %830 = vmatpush2.bf16.msra.mxu0 %v755
    %831 = vmatprep.subr.bf16.mxu0 0
    %832 = vmatpush2.bf16.msra.mxu0 %v754
    %833 = vmatprep.subr.bf16.mxu0 0
    %834 = vmatpush2.bf16.msra.mxu0 %v753
    %835 = vmatprep.subr.bf16.mxu0 0
    %836 = vmatpush2.bf16.msra.mxu0 %v752
    %837 = vmatprep.subr.bf16.mxu0 0
    %838 = vmatpush2.bf16.msra.mxu0 %v751
    %839 = vmatprep.mubr.bf16.mxu0 %v541
    %840 = vmatmul.mubr.bf16.gmra.mxu0 %v540
    %v841 = vpop.f32.mrf.mxu0
    %v842 = vadd.f32 %v613, %v841
    %v843 = vpop.f32.mrf.mxu0
    %v844 = vpop.f32.mrf.mxu0
    %v845 = vpop.f32.mrf.mxu0
    %846 = vdwg.mxu0
    %847 = vmatprep.subr.bf16.mxu0 0
    %848 = vmatpush1.bf16.msra.mxu0 %v766
    %849 = vmatprep.subr.bf16.mxu0 0
    %850 = vmatpush1.bf16.msra.mxu0 %v765
    %851 = vmatprep.subr.bf16.mxu0 0
    %852 = vmatpush1.bf16.msra.mxu0 %v764
    %853 = vmatprep.subr.bf16.mxu0 0
    %854 = vmatpush1.bf16.msra.mxu0 %v763
    %855 = vmatprep.subr.bf16.mxu0 0
    %856 = vmatpush1.bf16.msra.mxu0 %v762
    %857 = vmatprep.subr.bf16.mxu0 0
    %858 = vmatpush1.bf16.msra.mxu0 %v761
    %859 = vmatprep.subr.bf16.mxu0 0
    %860 = vmatpush1.bf16.msra.mxu0 %v760
    %861 = vmatprep.subr.bf16.mxu0 0
    %862 = vmatpush1.bf16.msra.mxu0 %v759
    %863 = vmatprep.subr.bf16.mxu0 0
    %864 = vmatpush2.bf16.msra.mxu0 %v774
    %865 = vmatprep.subr.bf16.mxu0 0
    %866 = vmatpush2.bf16.msra.mxu0 %v773
    %867 = vmatprep.subr.bf16.mxu0 0
    %868 = vmatpush2.bf16.msra.mxu0 %v772
    %869 = vmatprep.subr.bf16.mxu0 0
    %870 = vmatpush2.bf16.msra.mxu0 %v771
    %871 = vmatprep.subr.bf16.mxu0 0
    %872 = vmatpush2.bf16.msra.mxu0 %v770
    %873 = vmatprep.subr.bf16.mxu0 0
    %874 = vmatpush2.bf16.msra.mxu0 %v769
    %875 = vmatprep.subr.bf16.mxu0 0
    %876 = vmatpush2.bf16.msra.mxu0 %v768
    %877 = vmatprep.subr.bf16.mxu0 0
    %878 = vmatpush2.bf16.msra.mxu0 %v767
    %879 = vmatprep.mubr.bf16.mxu0 %v543
    %880 = vmatmul.mubr.bf16.gmra.mxu0 %v542
    %v881 = vpop.f32.mrf.mxu0
    %v882 = vadd.f32 %v842, %v881
    %v883 = vpop.f32.mrf.mxu0
    %v884 = vpop.f32.mrf.mxu0
    %v885 = vpop.f32.mrf.mxu0
    %886 = vdwg.mxu0
    %887 = vst [vmem:[#allocation2] sm:$0x3] %v882
    // Predicated region
    $region22: #{atari_dqn_forward.7} parent=1 // pred_check
      _
    $region23: #{atari_dqn_forward.7} parent=1 // pred_check_branch
      %889 = sbr.rel (0) target = $region25
    $region24: #{atari_dqn_forward.7} parent=1 // pred_region
      %s891 = ssub.s32 32, 32
      %892 = vsyncadd [#allocation3], %s891
      %s894 = sshll.u32 [#allocation2], 4
      %s895 = int_to_ptr.vmem [resolvable:$true] %s894
      %897 = dma.vmem_to_hbm [thread:$0]  %s895, 32, %s5, [#allocation3]
    $region25: #{atari_dqn_forward.7} parent=1 // pred_fallthru
      _
    // Predicated region
    $region26: #{atari_dqn_forward.7} parent=1 // pred_check
      _
    $region27: #{atari_dqn_forward.7} parent=1 // pred_check_branch
      %899 = sbr.rel (0) target = $region29
    $region28: #{atari_dqn_forward.7} parent=1 // pred_region
      %900 = dma.done [#allocation3], 32
    $region29: #{atari_dqn_forward.7} parent=1 // pred_fallthru
      _
    %901 = vsyncpa [#allocation3], 1

</llo_original>
